<compile_context>
chip_gen: v7x
topology: tpu7x:2x2x1
jax: 0.10.0
libtpu: 0.0.40
codegen_flags: <defaults>
</compile_context>

<pallas_src>
import functools

import jax
import jax.numpy as jnp
from jax.experimental import pallas as pl
from jax.experimental.pallas import tpu as pltpu


def _llama_mlp_kernel(x_ref, wgu_ref, wd_ref, o_ref, acc_ref, *, ti, n_i):
    # x_ref:   (tm, H)        token tile (resident across the I axis)
    # wgu_ref: (H, 2*ti)      fused [gate_j | up_j] weight tile (contiguous slab)
    # wd_ref:  (ti, H)        down-proj weight tile (contiguous slab)
    # o_ref:   (tm, H)        output tile (resident across the I axis)
    # acc_ref: (tm, H) f32    down-proj accumulator (unused when n_i == 1)
    j = pl.program_id(1)

    x = x_ref[...]

    # One MXU dot for both gate and up: (tm, H) @ (H, 2*ti) -> (tm, 2*ti), f32 acc.
    gu = jnp.dot(x, wgu_ref[...], preferred_element_type=jnp.float32)
    gate = gu[:, :ti]          # lane-aligned slices (ti % 128 == 0)
    up = gu[:, ti:]

    # SiluAndMul in f32 (sigmoid runs on the EUP).
    act = gate * jax.nn.sigmoid(gate) * up

    # Partial down_proj for this I-tile.
    partial = jnp.dot(act.astype(wd_ref.dtype), wd_ref[...],
                      preferred_element_type=jnp.float32)

    if n_i == 1:
        # Single reduction step: skip the accumulator entirely.
        o_ref[...] = partial.astype(o_ref.dtype)
    else:
        @pl.when(j == 0)
        def _first():
            # Overwrite: no zero-init store and no accumulator read this step.
            acc_ref[...] = partial

        @pl.when((j > 0) & (j < n_i - 1))
        def _middle():
            acc_ref[...] += partial

        @pl.when(j == n_i - 1)
        def _last():
            # Fold the final partial straight into the output cast; the
            # accumulator is never written back on the last step.
            o_ref[...] = (acc_ref[...] + partial).astype(o_ref.dtype)


def prepare_llama_mlp_weights(w_gate_up, w_down, *, ti):
    """One-time weight preparation (do this at weight-load time, not per call).

    w_gate_up: [2*I, H]  (PyTorch MergedColumnParallelLinear layout)
    w_down:    [H, I]    (PyTorch RowParallelLinear layout)

    Returns:
      w_gu: [n_i, H, 2*ti]  per-I-tile contiguous [gate_j | up_j] slabs
      w_d:  [n_i, ti, H]    per-I-tile contiguous transposed down-proj slabs
    (I is zero-padded to a multiple of ti; silu(0)*0 = 0 so padding is exact.)
    """
    assert ti % 128 == 0, "ti must be a multiple of 128 (lane alignment)"
    two_i, H = w_gate_up.shape
    I = two_i // 2
    assert w_down.shape == (H, I)
    I_pad = pl.cdiv(I, ti) * ti
    n_i = I_pad // ti

    w_g = w_gate_up[:I].T      # [H, I]
    w_u = w_gate_up[I:].T      # [H, I]
    w_d = w_down.T             # [I, H]
    if I_pad != I:
        pad = I_pad - I
        w_g = jnp.pad(w_g, ((0, 0), (0, pad)))
        w_u = jnp.pad(w_u, ((0, 0), (0, pad)))
        w_d = jnp.pad(w_d, ((0, pad), (0, 0)))

    # [n_i, H, 2*ti]: leading-dim slab j is one contiguous [gate_j | up_j] tile.
    w_gu = jnp.concatenate(
        [w_g.reshape(H, n_i, ti), w_u.reshape(H, n_i, ti)], axis=2
    ).transpose(1, 0, 2)
    # [n_i, ti, H]: leading-dim slab j is the contiguous down-proj tile.
    w_d = w_d.reshape(n_i, ti, H)
    return w_gu, w_d


def _device_vmem_bytes():
    try:
        info = pltpu.get_tpu_info()
        return int(getattr(info, "vmem_capacity_bytes", 128 << 20))
    except Exception:  # not on TPU / older runtime: assume 128 MiB
        return 128 << 20


def llama_mlp(x, w_gu, w_d, *, tm=None, weight_buffers=None):
    """Fused LlamaMLP forward.

    x:    [T, H]
    w_gu: [n_i, H, 2*ti]  from prepare_llama_mlp_weights
    w_d:  [n_i, ti, H]    from prepare_llama_mlp_weights

    Tile guidance (tm default picked from device VMEM if not given):
      v5e/v6e (128 MiB VMEM): tm=768, ti=1024 (prepare weights with ti=1024);
        on v5e consider weight_buffers=3 to absorb weight-DMA jitter.
      v7x (64 MiB VMEM/TC):  tm=512, ti=256..512 so the double-buffered
        footprint stays under ~48 MiB; the token axis is 'parallel' and
        shards across both TensorCores when there are >= 2 token tiles.
    """
    T, H = x.shape
    n_i, ti, H2 = w_d.shape
    assert H2 == H and w_gu.shape == (n_i, H, 2 * ti)
    assert ti % 128 == 0, "ti must be a multiple of 128"
    I_pad = n_i * ti

    vmem_cap = _device_vmem_bytes()

    # Sublane pack for x dtype (f32: 8, bf16: 16, int8/fp8: 32).
    xb = x.dtype.itemsize
    wb = w_gu.dtype.itemsize
    min_sub = 8 * max(1, 4 // xb)

    if tm is None:
        tm = 768 if vmem_cap >= (100 << 20) else 512
    # Clamp to the (sublane-rounded) token count, then round to the pack size.
    t_ceil = pl.cdiv(T, min_sub) * min_sub
    tm = max(min_sub, min(int(tm), t_ceil))
    tm = (tm // min_sub) * min_sub

    n_t = pl.cdiv(T, tm)
    T_pad = n_t * tm
    if T_pad != T:
        # Explicit padding: edge token blocks never read past the input.
        x = jnp.pad(x, ((0, T_pad - T), (0, 0)))

    # VMEM budget: double-buffered tiles + f32 accumulator + in-kernel f32
    # gate/up and act intermediates.
    footprint = (2 * (tm * H * xb)            # x tiles
                 + 2 * (H * 2 * ti * wb)      # fused gate/up weight tiles
                 + 2 * (ti * H * wb)          # down weight tiles
                 + 2 * (tm * H * xb)          # output tiles
                 + tm * H * 4                 # f32 accumulator scratch
                 + tm * 2 * ti * 4            # f32 gu intermediate
                 + tm * ti * 4)               # f32 act intermediate
    vmem_limit = int(min(vmem_cap - (8 << 20),
                         max(32 << 20, footprint * 5 // 4 + (2 << 20))))

    kernel = functools.partial(_llama_mlp_kernel, ti=ti, n_i=n_i)

    # Optional deeper weight-DMA buffering (e.g. 3 on v5e); default is the
    # standard double buffer.
    w_spec_kwargs = {}
    if weight_buffers is not None and weight_buffers != 2:
        w_spec_kwargs = dict(pipeline_mode=pl.Buffered(int(weight_buffers)))

    out = pl.pallas_call(
        kernel,
        out_shape=jax.ShapeDtypeStruct((T_pad, H), x.dtype),
        grid_spec=pltpu.PrefetchScalarGridSpec(
            num_scalar_prefetch=0,
            grid=(n_t, n_i),
            in_specs=[
                # x: resident over the reduction axis.
                pl.BlockSpec((tm, H), lambda i, j: (i, 0)),
                # [gate_j | up_j]: contiguous slab j, squeezed leading dim.
                pl.BlockSpec((None, H, 2 * ti), lambda i, j: (j, 0, 0),
                             **w_spec_kwargs),
                # down_j: contiguous slab j, squeezed leading dim.
                pl.BlockSpec((None, ti, H), lambda i, j: (j, 0, 0),
                             **w_spec_kwargs),
            ],
            out_specs=pl.BlockSpec((tm, H), lambda i, j: (i, 0)),
            scratch_shapes=[pltpu.VMEM((tm, H), jnp.float32)],
        ),
        compiler_params=pltpu.CompilerParams(
            dimension_semantics=("parallel", "arbitrary"),
            vmem_limit_bytes=vmem_limit,
        ),
        cost_estimate=pl.CostEstimate(
            flops=int(6 * T_pad * H * I_pad),
            transcendentals=int(T_pad * I_pad),
            # Weights are re-streamed once per token tile.
            bytes_accessed=int(n_t * (3 * H * I_pad) * wb + 2 * T_pad * H * xb),
        ),
    )(x, w_gu, w_d)

    return out[:T] if T_pad != T else out


def llama_mlp_ref(x, w_gate_up, w_down):
    """Pure-JAX reference matching the PyTorch module exactly."""
    I = w_gate_up.shape[0] // 2
    gate_up = x @ w_gate_up.T                     # [T, 2I]
    gate, up = gate_up[:, :I], gate_up[:, I:]
    act = jax.nn.silu(gate) * up                  # SiluAndMul
    return act @ w_down.T                         # [T, H]


if __name__ == "__main__":
    # Small but tiling-exercising shapes:
    #   * T=200 is not a multiple of tm=128 -> wrapper T-padding path
    #   * I=384 is not a multiple of ti=256 -> weight zero-padding path
    #   * grid = (2 token tiles, 2 I tiles) -> accumulator first/mid/last paths
    T, H, I = 200, 256, 384
    dtype = jnp.float32
    tm, ti = 128, 256

    key = jax.random.PRNGKey(0)
    kx, kgu, kd = jax.random.split(key, 3)
    x = jax.random.normal(kx, (T, H), dtype=dtype)
    w_gate_up = jax.random.normal(kgu, (2 * I, H), dtype=dtype) * 0.02
    w_down = jax.random.normal(kd, (H, I), dtype=dtype) * 0.02

    # One-time weight prep (would be cached at weight-load time in production).
    w_gu, w_d = prepare_llama_mlp_weights(w_gate_up, w_down, ti=ti)

    out = llama_mlp(x, w_gu, w_d, tm=tm)
    out = jax.block_until_ready(out)

    ref = llama_mlp_ref(x, w_gate_up, w_down)
    assert out.shape == (T, H)
    assert jnp.allclose(out, ref, atol=1e-4, rtol=1e-4), "mismatch vs reference"

    print("KERNEL_OK")
</pallas_src>

<mosaic_0001>
module attributes {stable_mosaic.version = 11 : i64} {
  func.func @_llama_mlp_kernel(%arg0: i32, %arg1: i32, %arg2: memref<128x256xf32, #tpu.memory_space<vmem>>, %arg3: memref<1x256x512xf32, #tpu.memory_space<vmem>>, %arg4: memref<1x256x256xf32, #tpu.memory_space<vmem>>, %arg5: memref<128x256xf32, #tpu.memory_space<vmem>>, %arg6: memref<128x256xf32, #tpu.memory_space<vmem>>) attributes {dimension_semantics = [#tpu.dimension_semantics<parallel>, #tpu.dimension_semantics<arbitrary>], iteration_bounds = array<i64: 2, 2>, scalar_prefetch = 0 : i64, scratch_operands = 1 : i64, tpu.core_type = #tpu.core_type<tc>, window_params = [{transform_indices = @transform_0, window_bounds = array<i64: 128, 256>}, {transform_indices = @transform_1, window_bounds = array<i64: 1, 256, 512>}, {transform_indices = @transform_2, window_bounds = array<i64: 1, 256, 256>}, {transform_indices = @transform_3, window_bounds = array<i64: 128, 256>}]} {
    %c0 = arith.constant 0 : index
    %c0_0 = arith.constant 0 : index
    %0 = vector.load %arg2[%c0, %c0_0] : memref<128x256xf32, #tpu.memory_space<vmem>>, vector<128x256xf32>
    %c0_1 = arith.constant 0 : index
    %c0_2 = arith.constant 0 : index
    %c0_3 = arith.constant 0 : index
    %1 = vector.load %arg3[%c0_1, %c0_2, %c0_3] : memref<1x256x512xf32, #tpu.memory_space<vmem>>, vector<1x256x512xf32>
    %2 = vector.shape_cast %1 : vector<1x256x512xf32> to vector<256x512xf32>
    %cst = arith.constant dense<0.000000e+00> : vector<128x512xf32>
    %3 = tpu.matmul %0, %2, %cst {dimension_numbers = #tpu.dot_dimension_numbers<[1], [0], [0], [1], [0, 0, 1, 1], [], []>} : vector<128x256xf32>, vector<256x512xf32>, vector<128x512xf32> -> vector<128x512xf32>
    %4 = vector.extract_strided_slice %3 {offsets = [0, 0], sizes = [128, 256], strides = [1, 1]} : vector<128x512xf32> to vector<128x256xf32>
    %5 = vector.extract_strided_slice %3 {offsets = [0, 256], sizes = [128, 256], strides = [1, 1]} : vector<128x512xf32> to vector<128x256xf32>
    %6 = arith.negf %4 : vector<128x256xf32>
    %7 = math.exp %6 : vector<128x256xf32>
    %cst_4 = arith.constant 1.000000e+00 : f32
    %8 = vector.broadcast %cst_4 : f32 to vector<128x256xf32>
    %9 = arith.addf %8, %7 : vector<128x256xf32>
    %10 = arith.divf %8, %9 : vector<128x256xf32>
    %11 = arith.mulf %4, %10 : vector<128x256xf32>
    %12 = arith.mulf %11, %5 : vector<128x256xf32>
    %c0_5 = arith.constant 0 : index
    %c0_6 = arith.constant 0 : index
    %c0_7 = arith.constant 0 : index
    %13 = vector.load %arg4[%c0_5, %c0_6, %c0_7] : memref<1x256x256xf32, #tpu.memory_space<vmem>>, vector<1x256x256xf32>
    %14 = vector.shape_cast %13 : vector<1x256x256xf32> to vector<256x256xf32>
    %cst_8 = arith.constant dense<0.000000e+00> : vector<128x256xf32>
    %15 = tpu.matmul %12, %14, %cst_8 {dimension_numbers = #tpu.dot_dimension_numbers<[1], [0], [0], [1], [0, 0, 1, 1], [], []>} : vector<128x256xf32>, vector<256x256xf32>, vector<128x256xf32> -> vector<128x256xf32>
    %c0_i32 = arith.constant 0 : i32
    %16 = arith.cmpi eq, %arg1, %c0_i32 : i32
    %17 = arith.extui %16 : i1 to i32
    %c0_i32_9 = arith.constant 0 : i32
    %18 = arith.cmpi ne, %17, %c0_i32_9 : i32
    scf.if %18 {
      %c0_14 = arith.constant 0 : index
      %c0_15 = arith.constant 0 : index
      %27 = vector.load %arg6[%c0_14, %c0_15] : memref<128x256xf32, #tpu.memory_space<vmem>>, vector<128x256xf32>
      tpu.vector_store %arg6[%c0_14, %c0_15], %15 {strides = array<i32>} : memref<128x256xf32, #tpu.memory_space<vmem>>, vector<128x256xf32>,
    } else {
    }
    %c0_i32_10 = arith.constant 0 : i32
    %19 = arith.cmpi sgt, %arg1, %c0_i32_10 : i32
    %c1_i32 = arith.constant 1 : i32
    %20 = arith.cmpi slt, %arg1, %c1_i32 : i32
    %21 = arith.andi %19, %20 : i1
    %22 = arith.extui %21 : i1 to i32
    %c0_i32_11 = arith.constant 0 : i32
    %23 = arith.cmpi ne, %22, %c0_i32_11 : i32
    scf.if %23 {
      %c0_14 = arith.constant 0 : index
      %c0_15 = arith.constant 0 : index
      %27 = vector.load %arg6[%c0_14, %c0_15] : memref<128x256xf32, #tpu.memory_space<vmem>>, vector<128x256xf32>
      %28 = arith.addf %27, %15 : vector<128x256xf32>
      %c0_16 = arith.constant 0 : index
      %c0_17 = arith.constant 0 : index
      %29 = vector.load %arg6[%c0_16, %c0_17] : memref<128x256xf32, #tpu.memory_space<vmem>>, vector<128x256xf32>
      tpu.vector_store %arg6[%c0_16, %c0_17], %28 {strides = array<i32>} : memref<128x256xf32, #tpu.memory_space<vmem>>, vector<128x256xf32>,
    } else {
    }
    %c1_i32_12 = arith.constant 1 : i32
    %24 = arith.cmpi eq, %arg1, %c1_i32_12 : i32
    %25 = arith.extui %24 : i1 to i32
    %c0_i32_13 = arith.constant 0 : i32
    %26 = arith.cmpi ne, %25, %c0_i32_13 : i32
    scf.if %26 {
      %c0_14 = arith.constant 0 : index
      %c0_15 = arith.constant 0 : index
      %27 = vector.load %arg6[%c0_14, %c0_15] : memref<128x256xf32, #tpu.memory_space<vmem>>, vector<128x256xf32>
      %28 = arith.addf %27, %15 : vector<128x256xf32>
      %c0_16 = arith.constant 0 : index
      %c0_17 = arith.constant 0 : index
      %29 = vector.load %arg5[%c0_16, %c0_17] : memref<128x256xf32, #tpu.memory_space<vmem>>, vector<128x256xf32>
      tpu.vector_store %arg5[%c0_16, %c0_17], %28 {strides = array<i32>} : memref<128x256xf32, #tpu.memory_space<vmem>>, vector<128x256xf32>,
    } else {
    }
    return
  }
  func.func @transform_0(%arg0: i32, %arg1: i32) -> (i32, i32) {
    %c0_i32 = arith.constant 0 : i32
    %c0_i32_0 = arith.constant 0 : i32
    return %arg0, %c0_i32 : i32, i32
  }
  func.func @transform_1(%arg0: i32, %arg1: i32) -> (i32, i32, i32) {
    %c0_i32 = arith.constant 0 : i32
    %c0_i32_0 = arith.constant 0 : i32
    %c0_i32_1 = arith.constant 0 : i32
    return %arg1, %c0_i32, %c0_i32_0 : i32, i32, i32
  }
  func.func @transform_2(%arg0: i32, %arg1: i32) -> (i32, i32, i32) {
    %c0_i32 = arith.constant 0 : i32
    %c0_i32_0 = arith.constant 0 : i32
    %c0_i32_1 = arith.constant 0 : i32
    return %arg1, %c0_i32, %c0_i32_0 : i32, i32, i32
  }
  func.func @transform_3(%arg0: i32, %arg1: i32) -> (i32, i32) {
    %c0_i32 = arith.constant 0 : i32
    %c0_i32_0 = arith.constant 0 : i32
    return %arg0, %c0_i32 : i32, i32
  }
}

</mosaic_0001>

<llo_original>
// kernel: tpu_custom_call.1
$region0: #{tpu_custom_call.1}
  #allocation0 [shape = 'u32[]', space=smem, size = 0x4, offset = 0x4, fixed_abs, tag = 'smem constant byte address 0x4 - core index']
  #allocation1 [shape = 'u32[144,128]{1,0:T(1,128)}', space=vmem, size = 0x12000, scoped, tag = 'internal scratch']
  #allocation2 [shape = 'f32[128,256]{1,0:T(8,128)}', space=vmem, size = 0x20000, scoped, tag = 'scratch operand']
  %s0 = inlined_call_operand.hbm [shape: f32[256,256], index: 0, kind: input, shape index: {}]
  %s1 = inlined_call_operand.hbm [shape: f32[2,256,512], index: 1, kind: input, shape index: {}]
  %s2 = inlined_call_operand.hbm [shape: f32[2,256,256], index: 2, kind: input, shape index: {}]
  %s3 = inlined_call_operand.hbm [shape: f32[256,256], index: 3, kind: output, shape index: {}]
  %s4 = sld [smem:[#allocation0]]
  $region69: #{tpu_custom_call.1} parent=0
    _
  %s6 = ssub.s32 1, %s4
  %s7 = scalar_select 0, %s6, %s4
  $region1: #{tpu_custom_call.1} parent=0
    #allocation3 [shape = 'u8[262144]{0}', space=vmem, size = 0x40000, scoped, tag = 'input window, operand 0']
    #allocation4 [shape = 's32[2]{0}', space=sflag, size = 0x8, scoped, tag = 'scoped memory for tpu_custom_call.1']
    #allocation5 [shape = 's32[2]{0}', space=sflag, size = 0x8, scoped, tag = 'scoped memory for tpu_custom_call.1']
    #allocation6 [shape = 'u8[1048576]{0}', space=vmem, size = 0x100000, scoped, tag = 'input window, operand 1']
    #allocation7 [shape = 's32[2]{0}', space=sflag, size = 0x8, scoped, tag = 'scoped memory for tpu_custom_call.1']
    #allocation8 [shape = 'u8[524288]{0}', space=vmem, size = 0x80000, scoped, tag = 'input window, operand 2']
    #allocation9 [shape = 'u8[262144]{0}', space=vmem, size = 0x40000, scoped, tag = 'output window, operand 0']
    %8 = vsyncpa [#allocation4], 0
    %s9 = scalar_lea.sflag [#allocation4], 1
    %10 = vsyncpa %s9, 0
    %11 = vsyncpa [#allocation7], 0
    %s12 = scalar_lea.sflag [#allocation7], 1
    %13 = vsyncpa %s12, 0
    %14 = vsyncpa [#allocation5], 0
    %s15 = scalar_lea.sflag [#allocation5], 1
    %16 = vsyncpa %s15, 0
    loop: start=0, step=1, limit=6
    $region2: #{tpu_custom_call.1} parent=1 // loop_pre_header
      _
    $region3: #{tpu_custom_call.1} parent=1 // loop_header
      %s18 = sphi 0, %s22
      %p19 = scmp.ge.s32.totalorder %s18, 6
      %s25 = sphi 0, %s37
      %s26 = sphi 0, %s33
      %s27 = sphi 0, %s25
      %s28 = sphi 0, %s26
      %s29 = sphi 0, %s27
      %s30 = sphi 0, %s28
      %s40 = sphi 0, %s42
      %s43 = sphi 0, %s40
      %s44 = sphi 0, %s43
      %s60 = sphi 0, %s44
      %s66 = sphi 0, %s68
      %s69 = sphi 0, %s66
      %s70 = sphi 0, %s69
      %s86 = sphi 0, %s70
      %s92 = sphi 0, %s94
      %s95 = sphi 0, %s92
      %s96 = sphi 0, %s95
      %s112 = sphi 0, %s96
      %s118 = sphi 0, %s120
      %s121 = sphi 0, %s118
      %s122 = sphi 0, %s121
      %s138 = sphi 0, %s122
    $region4: #{tpu_custom_call.1} parent=1 // loop_header_branch
      %21 = sbr.rel (%p19) target = $region8
    $region5: #{tpu_custom_call.1} parent=1 // loop_body
      %s23 = ssub.s32 %s18, 1
      %s24 = ssub.s32 %s18, 2
      %s31 = sadd.s32 1, %s26
      %p32 = scmp.ge.s32.totalorder %s31, 2
      %s33 = scalar_select %p32, 0, %s31
      %s34 = sadd.s32 1, %s25
      %s35 = scalar_select %p32, %s34, %s25
      %p36 = scmp.ge.s32.totalorder %s35, 2
      %s37 = scalar_select %p36, 0, %s35
      %s38 = ssub.s32 %s25, %s37
      %p39 = scmp.eq.s32.totalorder %s38, 0
      %s41 = sadd.s32 %s40, 1
      %s42 = scalar_select %p39, %s40, %s41
      %p45 = pneg %p39
      %p46 = scmp.eq.s32.totalorder %s18, 3
      %p47 = por %p45, %p46
      %p48 = scmp.ne.s32.totalorder %s40, %s43
      %p49 = scmp.eq.s32.totalorder %s18, 0
      %p50 = por %p48, %p49
      %p51 = scmp.ne.s32.totalorder %s40, %s43
      %p52 = scmp.eq.s32.totalorder %s23, 3
      %p53 = por %p51, %p52
      %p54 = scmp.ne.s32.totalorder %s43, %s44
      %p55 = scmp.eq.s32.totalorder %s23, 0
      %p56 = por %p54, %p55
      %p57 = scmp.ne.s32.totalorder %s43, %s44
      %p58 = scmp.eq.s32.totalorder %s24, 3
      %p59 = por %p57, %p58
      %p61 = scmp.ne.s32.totalorder %s44, %s60
      %p62 = scmp.eq.s32.totalorder %s24, 0
      %p63 = por %p61, %p62
      %s64 = ssub.s32 %s26, %s33
      %p65 = scmp.eq.s32.totalorder %s64, 0
      %s67 = sadd.s32 %s66, 1
      %s68 = scalar_select %p65, %s66, %s67
      %p71 = pneg %p65
      %p72 = scmp.eq.s32.totalorder %s18, 3
      %p73 = por %p71, %p72
      %p74 = scmp.ne.s32.totalorder %s66, %s69
      %p75 = scmp.eq.s32.totalorder %s18, 0
      %p76 = por %p74, %p75
      %p77 = scmp.ne.s32.totalorder %s66, %s69
      %p78 = scmp.eq.s32.totalorder %s23, 3
      %p79 = por %p77, %p78
      %p80 = scmp.ne.s32.totalorder %s69, %s70
      %p81 = scmp.eq.s32.totalorder %s23, 0
      %p82 = por %p80, %p81
      %p83 = scmp.ne.s32.totalorder %s69, %s70
      %p84 = scmp.eq.s32.totalorder %s24, 3
      %p85 = por %p83, %p84
      %p87 = scmp.ne.s32.totalorder %s70, %s86
      %p88 = scmp.eq.s32.totalorder %s24, 0
      %p89 = por %p87, %p88
      %s90 = ssub.s32 %s26, %s33
      %p91 = scmp.eq.s32.totalorder %s90, 0
      %s93 = sadd.s32 %s92, 1
      %s94 = scalar_select %p91, %s92, %s93
      %p97 = pneg %p91
      %p98 = scmp.eq.s32.totalorder %s18, 3
      %p99 = por %p97, %p98
      %p100 = scmp.ne.s32.totalorder %s92, %s95
      %p101 = scmp.eq.s32.totalorder %s18, 0
      %p102 = por %p100, %p101
      %p103 = scmp.ne.s32.totalorder %s92, %s95
      %p104 = scmp.eq.s32.totalorder %s23, 3
      %p105 = por %p103, %p104
      %p106 = scmp.ne.s32.totalorder %s95, %s96
      %p107 = scmp.eq.s32.totalorder %s23, 0
      %p108 = por %p106, %p107
      %p109 = scmp.ne.s32.totalorder %s95, %s96
      %p110 = scmp.eq.s32.totalorder %s24, 3
      %p111 = por %p109, %p110
      %p113 = scmp.ne.s32.totalorder %s96, %s112
      %p114 = scmp.eq.s32.totalorder %s24, 0
      %p115 = por %p113, %p114
      %s116 = ssub.s32 %s25, %s37
      %p117 = scmp.eq.s32.totalorder %s116, 0
      %s119 = sadd.s32 %s118, 1
      %s120 = scalar_select %p117, %s118, %s119
      %p123 = pneg %p117
      %p124 = scmp.eq.s32.totalorder %s18, 3
      %p125 = por %p123, %p124
      %p126 = scmp.ne.s32.totalorder %s118, %s121
      %p127 = scmp.eq.s32.totalorder %s18, 0
      %p128 = por %p126, %p127
      %p129 = scmp.ne.s32.totalorder %s118, %s121
      %p130 = scmp.eq.s32.totalorder %s23, 3
      %p131 = por %p129, %p130
      %p132 = scmp.ne.s32.totalorder %s121, %s122
      %p133 = scmp.eq.s32.totalorder %s23, 0
      %p134 = por %p132, %p133
      %p135 = scmp.ne.s32.totalorder %s121, %s122
      %p136 = scmp.eq.s32.totalorder %s24, 3
      %p137 = por %p135, %p136
      %p139 = scmp.ne.s32.totalorder %s122, %s138
      %p140 = scmp.eq.s32.totalorder %s24, 0
      %p141 = por %p139, %p140
      %p142 = scmp.le.s32.totalorder 1, %s18
      %p143 = scmp.lt.s32.totalorder %s18, 5
      %p144 = pnand %p142, %p143
      %p145 = pneg %p144
      // Predicated region
      $region9: #{tpu_custom_call.1} parent=5 // pred_check
        _
      $region10: #{tpu_custom_call.1} parent=5 // pred_check_branch
        %147 = sbr.rel (%p144) target = $region12
      $region11: #{tpu_custom_call.1} parent=5 // pred_region
        %s148 = ssub.s32 %s18, 1
      $region12: #{tpu_custom_call.1} parent=5 // pred_fallthru
        _
      %p149 = scmp.lt.s32.totalorder %s18, 4
      // Predicated region
      $region13: #{tpu_custom_call.1} parent=5 // pred_check
        %p150 = pneg %p149
      $region14: #{tpu_custom_call.1} parent=5 // pred_check_branch
        %152 = sbr.rel (%p150) target = $region16
      $region15: #{tpu_custom_call.1} parent=5 // pred_region
        // Predicated region
        $region17: #{tpu_custom_call.1} parent=15 // pred_check
          %p153 = pneg %p50
        $region18: #{tpu_custom_call.1} parent=15 // pred_check_branch
          %155 = sbr.rel (%p153) target = $region20
        $region19: #{tpu_custom_call.1} parent=15 // pred_region
          %s156 = sand.u32 %s40, 1
          %s157 = scalar_lea.sflag [#allocation4], %s156
          %s158 = sand.u32 %s40, 1
          %s159 = smul.addr %s158, 256
          %s160 = scalar_lea.vmem [#allocation3], %s159
          %s161 = smul.u32 16, %s25
          %s163 = ssub.s32 4096, 4096
          %164 = vsyncadd %s157, %s163
          %s165 = smul.addr %s161, 2
          %s166 = smul.addr %s165, 128
          %s167 = scalar_lea.hbm %s0, %s166
          %s168 = sshll.u32 %s160, 4
          %s169 = int_to_ptr.vmem [resolvable:$true] %s168
          %174 = dma.hbm_to_vmem [thread:$0]  %s167, 4096, %s169, %s157, 256, 256, 16
        $region20: #{tpu_custom_call.1} parent=15 // pred_fallthru
          _
        // Predicated region
        $region21: #{tpu_custom_call.1} parent=15 // pred_check
          %p175 = pneg %p76
        $region22: #{tpu_custom_call.1} parent=15 // pred_check_branch
          %177 = sbr.rel (%p175) target = $region24
        $region23: #{tpu_custom_call.1} parent=15 // pred_region
          %s178 = sand.u32 %s18, 1
          %s179 = scalar_lea.sflag [#allocation7], %s178
          %s180 = sand.u32 %s66, 1
          %s181 = smul.addr %s180, 1024
          %s182 = scalar_lea.vmem [#allocation6], %s181
          %s184 = ssub.s32 16384, 16384
          %185 = vsyncadd %s179, %s184
          %s186 = smul.addr %s26, 128
          %s187 = smul.addr %s186, 128
          %s188 = scalar_lea.hbm %s1, %s187
          %s189 = sshll.u32 %s182, 4
          %s190 = int_to_ptr.vmem [resolvable:$true] %s189
          %195 = dma.hbm_to_vmem [thread:$0]  %s188, 16384, %s190, %s179, 512, 512, 32
        $region24: #{tpu_custom_call.1} parent=15 // pred_fallthru
          _
        // Predicated region
        $region25: #{tpu_custom_call.1} parent=15 // pred_check
          %p196 = pneg %p102
        $region26: #{tpu_custom_call.1} parent=15 // pred_check_branch
          %198 = sbr.rel (%p196) target = $region28
        $region27: #{tpu_custom_call.1} parent=15 // pred_region
          %s199 = sand.u32 %s18, 1
          %s200 = scalar_lea.sflag [#allocation7], %s199
          %s201 = sand.u32 %s92, 1
          %s202 = smul.addr %s201, 512
          %s203 = scalar_lea.vmem [#allocation8], %s202
          %s205 = ssub.s32 8192, 8192
          %206 = vsyncadd %s200, %s205
          %s207 = smul.addr %s26, 64
          %s208 = smul.addr %s207, 128
          %s209 = scalar_lea.hbm %s2, %s208
          %s210 = sshll.u32 %s203, 4
          %s211 = int_to_ptr.vmem [resolvable:$true] %s210
          %216 = dma.hbm_to_vmem [thread:$0]  %s209, 8192, %s211, %s200, 256, 256, 16
        $region28: #{tpu_custom_call.1} parent=15 // pred_fallthru
          _
      $region16: #{tpu_custom_call.1} parent=5 // pred_fallthru
        _
      %p217 = scmp.le.s32.totalorder 1, %s18
      %p218 = scmp.lt.s32.totalorder %s18, 5
      %p219 = pnand %p217, %p218
      %p220 = pneg %p219
      // Predicated region
      $region29: #{tpu_custom_call.1} parent=5 // pred_check
        _
      $region30: #{tpu_custom_call.1} parent=5 // pred_check_branch
        %222 = sbr.rel (%p219) target = $region32
      $region31: #{tpu_custom_call.1} parent=5 // pred_region
        %s223 = ssub.s32 %s18, 1
        %s224 = sand.u32 %s43, 1
        %s225 = scalar_lea.sflag [#allocation4], %s224
        %s226 = sand.u32 %s43, 1
        %s227 = smul.addr %s226, 256
        %s228 = scalar_lea.vmem [#allocation3], %s227
        // Predicated region
        $region33: #{tpu_custom_call.1} parent=31 // pred_check
          %p229 = pneg %p56
        $region34: #{tpu_custom_call.1} parent=31 // pred_check_branch
          %231 = sbr.rel (%p229) target = $region36
        $region35: #{tpu_custom_call.1} parent=31 // pred_region
          %232 = dma.done %s225, 4096
        $region36: #{tpu_custom_call.1} parent=31 // pred_fallthru
          _
        %s233 = sand.u32 %s23, 1
        %s234 = scalar_lea.sflag [#allocation7], %s233
        %s235 = sand.u32 %s69, 1
        %s236 = smul.addr %s235, 1024
        %s237 = scalar_lea.vmem [#allocation6], %s236
        // Predicated region
        $region37: #{tpu_custom_call.1} parent=31 // pred_check
          %p238 = pneg %p82
        $region38: #{tpu_custom_call.1} parent=31 // pred_check_branch
          %240 = sbr.rel (%p238) target = $region40
        $region39: #{tpu_custom_call.1} parent=31 // pred_region
          %241 = dma.done %s234, 16384
        $region40: #{tpu_custom_call.1} parent=31 // pred_fallthru
          _
        %s242 = sand.u32 %s23, 1
        %s243 = scalar_lea.sflag [#allocation7], %s242
        %s244 = sand.u32 %s95, 1
        %s245 = smul.addr %s244, 512
        %s246 = scalar_lea.vmem [#allocation8], %s245
        // Predicated region
        $region41: #{tpu_custom_call.1} parent=31 // pred_check
          %p247 = pneg %p108
        $region42: #{tpu_custom_call.1} parent=31 // pred_check_branch
          %249 = sbr.rel (%p247) target = $region44
        $region43: #{tpu_custom_call.1} parent=31 // pred_region
          %250 = dma.done %s243, 8192
        $region44: #{tpu_custom_call.1} parent=31 // pred_fallthru
          _
        %s251 = sand.u32 %s43, 1
        %s252 = scalar_lea.sflag [#allocation4], %s251
        %s253 = sand.u32 %s43, 1
        %s254 = smul.addr %s253, 256
        %s255 = scalar_lea.vmem [#allocation3], %s254
        %p256 = pneg %p56
        %p257 = pneg %p53
        %s258 = sand.u32 %s23, 1
        %s259 = scalar_lea.sflag [#allocation7], %s258
        %s260 = sand.u32 %s69, 1
        %s261 = smul.addr %s260, 1024
        %s262 = scalar_lea.vmem [#allocation6], %s261
        %p263 = pneg %p82
        %p264 = pneg %p79
        %s265 = sand.u32 %s23, 1
        %s266 = scalar_lea.sflag [#allocation7], %s265
        %s267 = sand.u32 %s95, 1
        %s268 = smul.addr %s267, 512
        %s269 = scalar_lea.vmem [#allocation8], %s268
        %p270 = pneg %p108
        %p271 = pneg %p105
        %p272 = pneg %p134
        %p273 = pneg %p131
        %s274 = sand.u32 %s121, 1
        %s275 = scalar_lea.sflag [#allocation5], %s274
        %s276 = sand.u32 %s121, 1
        %s277 = smul.addr %s276, 256
        %s278 = scalar_lea.vmem [#allocation9], %s277
        %s279 = smul.u32 16, %s27
        %s280 = smul.u32 16, %s27
        %v281 = vld [vmem:[%s228] sm:$0xff]
        %v282 = vld [vmem:[%s228 + $0x8] sm:$0xff]
        %v283 = vld [vmem:[%s228 + $0x10] sm:$0xff]
        %v284 = vld [vmem:[%s228 + $0x18] sm:$0xff]
        %v285 = vld [vmem:[%s228 + $0x20] sm:$0xff]
        %v286 = vld [vmem:[%s228 + $0x28] sm:$0xff]
        %v287 = vld [vmem:[%s228 + $0x30] sm:$0xff]
        %v288 = vld [vmem:[%s228 + $0x38] sm:$0xff]
        %v289 = vld [vmem:[%s228 + $0x40] sm:$0xff]
        %v290 = vld [vmem:[%s228 + $0x48] sm:$0xff]
        %v291 = vld [vmem:[%s228 + $0x50] sm:$0xff]
        %v292 = vld [vmem:[%s228 + $0x58] sm:$0xff]
        %v293 = vld [vmem:[%s228 + $0x60] sm:$0xff]
        %v294 = vld [vmem:[%s228 + $0x68] sm:$0xff]
        %v295 = vld [vmem:[%s228 + $0x70] sm:$0xff]
        %v296 = vld [vmem:[%s228 + $0x78] sm:$0xff]
        %v297 = vld [vmem:[%s228 + $0x80] sm:$0xff]
        %v298 = vld [vmem:[%s228 + $0x88] sm:$0xff]
        %v299 = vld [vmem:[%s228 + $0x90] sm:$0xff]
        %v300 = vld [vmem:[%s228 + $0x98] sm:$0xff]
        %v301 = vld [vmem:[%s228 + $0xa0] sm:$0xff]
        %v302 = vld [vmem:[%s228 + $0xa8] sm:$0xff]
        %v303 = vld [vmem:[%s228 + $0xb0] sm:$0xff]
        %v304 = vld [vmem:[%s228 + $0xb8] sm:$0xff]
        %v305 = vld [vmem:[%s228 + $0xc0] sm:$0xff]
        %v306 = vld [vmem:[%s228 + $0xc8] sm:$0xff]
        %v307 = vld [vmem:[%s228 + $0xd0] sm:$0xff]
        %v308 = vld [vmem:[%s228 + $0xd8] sm:$0xff]
        %v309 = vld [vmem:[%s228 + $0xe0] sm:$0xff]
        %v310 = vld [vmem:[%s228 + $0xe8] sm:$0xff]
        %v311 = vld [vmem:[%s228 + $0xf0] sm:$0xff]
        %v312 = vld [vmem:[%s228 + $0xf8] sm:$0xff]
        %v313 = vld [vmem:[%s237] sm:$0xff]
        %v314 = vld [vmem:[%s237 + $0x8] sm:$0xff]
        %v315 = vld [vmem:[%s237 + $0x10] sm:$0xff]
        %v316 = vld [vmem:[%s237 + $0x18] sm:$0xff]
        %v317 = vld [vmem:[%s237 + $0x20] sm:$0xff]
        %v318 = vld [vmem:[%s237 + $0x28] sm:$0xff]
        %v319 = vld [vmem:[%s237 + $0x30] sm:$0xff]
        %v320 = vld [vmem:[%s237 + $0x38] sm:$0xff]
        %v321 = vld [vmem:[%s237 + $0x40] sm:$0xff]
        %v322 = vld [vmem:[%s237 + $0x48] sm:$0xff]
        %v323 = vld [vmem:[%s237 + $0x50] sm:$0xff]
        %v324 = vld [vmem:[%s237 + $0x58] sm:$0xff]
        %v325 = vld [vmem:[%s237 + $0x60] sm:$0xff]
        %v326 = vld [vmem:[%s237 + $0x68] sm:$0xff]
        %v327 = vld [vmem:[%s237 + $0x70] sm:$0xff]
        %v328 = vld [vmem:[%s237 + $0x78] sm:$0xff]
        %v329 = vld [vmem:[%s237 + $0x80] sm:$0xff]
        %v330 = vld [vmem:[%s237 + $0x88] sm:$0xff]
        %v331 = vld [vmem:[%s237 + $0x90] sm:$0xff]
        %v332 = vld [vmem:[%s237 + $0x98] sm:$0xff]
        %v333 = vld [vmem:[%s237 + $0xa0] sm:$0xff]
        %v334 = vld [vmem:[%s237 + $0xa8] sm:$0xff]
        %v335 = vld [vmem:[%s237 + $0xb0] sm:$0xff]
        %v336 = vld [vmem:[%s237 + $0xb8] sm:$0xff]
        %v337 = vld [vmem:[%s237 + $0xc0] sm:$0xff]
        %v338 = vld [vmem:[%s237 + $0xc8] sm:$0xff]
        %v339 = vld [vmem:[%s237 + $0xd0] sm:$0xff]
        %v340 = vld [vmem:[%s237 + $0xd8] sm:$0xff]
        %v341 = vld [vmem:[%s237 + $0xe0] sm:$0xff]
        %v342 = vld [vmem:[%s237 + $0xe8] sm:$0xff]
        %v343 = vld [vmem:[%s237 + $0xf0] sm:$0xff]
        %v344 = vld [vmem:[%s237 + $0xf8] sm:$0xff]
        %v345 = vld [vmem:[%s237 + $0x100] sm:$0xff]
        %v346 = vld [vmem:[%s237 + $0x108] sm:$0xff]
        %v347 = vld [vmem:[%s237 + $0x110] sm:$0xff]
        %v348 = vld [vmem:[%s237 + $0x118] sm:$0xff]
        %v349 = vld [vmem:[%s237 + $0x120] sm:$0xff]
        %v350 = vld [vmem:[%s237 + $0x128] sm:$0xff]
        %v351 = vld [vmem:[%s237 + $0x130] sm:$0xff]
        %v352 = vld [vmem:[%s237 + $0x138] sm:$0xff]
        %v353 = vld [vmem:[%s237 + $0x140] sm:$0xff]
        %v354 = vld [vmem:[%s237 + $0x148] sm:$0xff]
        %v355 = vld [vmem:[%s237 + $0x150] sm:$0xff]
        %v356 = vld [vmem:[%s237 + $0x158] sm:$0xff]
        %v357 = vld [vmem:[%s237 + $0x160] sm:$0xff]
        %v358 = vld [vmem:[%s237 + $0x168] sm:$0xff]
        %v359 = vld [vmem:[%s237 + $0x170] sm:$0xff]
        %v360 = vld [vmem:[%s237 + $0x178] sm:$0xff]
        %v361 = vld [vmem:[%s237 + $0x180] sm:$0xff]
        %v362 = vld [vmem:[%s237 + $0x188] sm:$0xff]
        %v363 = vld [vmem:[%s237 + $0x190] sm:$0xff]
        %v364 = vld [vmem:[%s237 + $0x198] sm:$0xff]
        %v365 = vld [vmem:[%s237 + $0x1a0] sm:$0xff]
        %v366 = vld [vmem:[%s237 + $0x1a8] sm:$0xff]
        %v367 = vld [vmem:[%s237 + $0x1b0] sm:$0xff]
        %v368 = vld [vmem:[%s237 + $0x1b8] sm:$0xff]
        %v369 = vld [vmem:[%s237 + $0x1c0] sm:$0xff]
        %v370 = vld [vmem:[%s237 + $0x1c8] sm:$0xff]
        %v371 = vld [vmem:[%s237 + $0x1d0] sm:$0xff]
        %v372 = vld [vmem:[%s237 + $0x1d8] sm:$0xff]
        %v373 = vld [vmem:[%s237 + $0x1e0] sm:$0xff]
        %v374 = vld [vmem:[%s237 + $0x1e8] sm:$0xff]
        %v375 = vld [vmem:[%s237 + $0x1f0] sm:$0xff]
        %v376 = vld [vmem:[%s237 + $0x1f8] sm:$0xff]
        %v377 = vld [vmem:[%s237 + $0x200] sm:$0xff]
        %v378 = vld [vmem:[%s237 + $0x208] sm:$0xff]
        %v379 = vld [vmem:[%s237 + $0x210] sm:$0xff]
        %v380 = vld [vmem:[%s237 + $0x218] sm:$0xff]
        %v381 = vld [vmem:[%s237 + $0x220] sm:$0xff]
        %v382 = vld [vmem:[%s237 + $0x228] sm:$0xff]
        %v383 = vld [vmem:[%s237 + $0x230] sm:$0xff]
        %v384 = vld [vmem:[%s237 + $0x238] sm:$0xff]
        %v385 = vld [vmem:[%s237 + $0x240] sm:$0xff]
        %v386 = vld [vmem:[%s237 + $0x248] sm:$0xff]
        %v387 = vld [vmem:[%s237 + $0x250] sm:$0xff]
        %v388 = vld [vmem:[%s237 + $0x258] sm:$0xff]
        %v389 = vld [vmem:[%s237 + $0x260] sm:$0xff]
        %v390 = vld [vmem:[%s237 + $0x268] sm:$0xff]
        %v391 = vld [vmem:[%s237 + $0x270] sm:$0xff]
        %v392 = vld [vmem:[%s237 + $0x278] sm:$0xff]
        %v393 = vld [vmem:[%s237 + $0x280] sm:$0xff]
        %v394 = vld [vmem:[%s237 + $0x288] sm:$0xff]
        %v395 = vld [vmem:[%s237 + $0x290] sm:$0xff]
        %v396 = vld [vmem:[%s237 + $0x298] sm:$0xff]
        %v397 = vld [vmem:[%s237 + $0x2a0] sm:$0xff]
        %v398 = vld [vmem:[%s237 + $0x2a8] sm:$0xff]
        %v399 = vld [vmem:[%s237 + $0x2b0] sm:$0xff]
        %v400 = vld [vmem:[%s237 + $0x2b8] sm:$0xff]
        %v401 = vld [vmem:[%s237 + $0x2c0] sm:$0xff]
        %v402 = vld [vmem:[%s237 + $0x2c8] sm:$0xff]
        %v403 = vld [vmem:[%s237 + $0x2d0] sm:$0xff]
        %v404 = vld [vmem:[%s237 + $0x2d8] sm:$0xff]
        %v405 = vld [vmem:[%s237 + $0x2e0] sm:$0xff]
        %v406 = vld [vmem:[%s237 + $0x2e8] sm:$0xff]
        %v407 = vld [vmem:[%s237 + $0x2f0] sm:$0xff]
        %v408 = vld [vmem:[%s237 + $0x2f8] sm:$0xff]
        %v409 = vld [vmem:[%s237 + $0x300] sm:$0xff]
        %v410 = vld [vmem:[%s237 + $0x308] sm:$0xff]
        %v411 = vld [vmem:[%s237 + $0x310] sm:$0xff]
        %v412 = vld [vmem:[%s237 + $0x318] sm:$0xff]
        %v413 = vld [vmem:[%s237 + $0x320] sm:$0xff]
        %v414 = vld [vmem:[%s237 + $0x328] sm:$0xff]
        %v415 = vld [vmem:[%s237 + $0x330] sm:$0xff]
        %v416 = vld [vmem:[%s237 + $0x338] sm:$0xff]
        %v417 = vld [vmem:[%s237 + $0x340] sm:$0xff]
        %v418 = vld [vmem:[%s237 + $0x348] sm:$0xff]
        %v419 = vld [vmem:[%s237 + $0x350] sm:$0xff]
        %v420 = vld [vmem:[%s237 + $0x358] sm:$0xff]
        %v421 = vld [vmem:[%s237 + $0x360] sm:$0xff]
        %v422 = vld [vmem:[%s237 + $0x368] sm:$0xff]
        %v423 = vld [vmem:[%s237 + $0x370] sm:$0xff]
        %v424 = vld [vmem:[%s237 + $0x378] sm:$0xff]
        %v425 = vld [vmem:[%s237 + $0x380] sm:$0xff]
        %v426 = vld [vmem:[%s237 + $0x388] sm:$0xff]
        %v427 = vld [vmem:[%s237 + $0x390] sm:$0xff]
        %v428 = vld [vmem:[%s237 + $0x398] sm:$0xff]
        %v429 = vld [vmem:[%s237 + $0x3a0] sm:$0xff]
        %v430 = vld [vmem:[%s237 + $0x3a8] sm:$0xff]
        %v431 = vld [vmem:[%s237 + $0x3b0] sm:$0xff]
        %v432 = vld [vmem:[%s237 + $0x3b8] sm:$0xff]
        %v433 = vld [vmem:[%s237 + $0x3c0] sm:$0xff]
        %v434 = vld [vmem:[%s237 + $0x3c8] sm:$0xff]
        %v435 = vld [vmem:[%s237 + $0x3d0] sm:$0xff]
        %v436 = vld [vmem:[%s237 + $0x3d8] sm:$0xff]
        %v437 = vld [vmem:[%s237 + $0x3e0] sm:$0xff]
        %v438 = vld [vmem:[%s237 + $0x3e8] sm:$0xff]
        %v439 = vld [vmem:[%s237 + $0x3f0] sm:$0xff]
        %v440 = vld [vmem:[%s237 + $0x3f8] sm:$0xff]
        %441 = vmatprep.subr.mxu0 %v314
        %442 = vmatpush1.msra.mxu0 %v313
        %443 = vmatprep.subr.mxu0 %v318
        %444 = vmatpush1.msra.mxu0 %v317
        %445 = vmatprep.subr.mxu0 %v322
        %446 = vmatpush1.msra.mxu0 %v321
        %447 = vmatprep.subr.mxu0 %v326
        %448 = vmatpush1.msra.mxu0 %v325
        %449 = vmatprep.subr.mxu0 %v330
        %450 = vmatpush1.msra.mxu0 %v329
        %451 = vmatprep.subr.mxu0 %v334
        %452 = vmatpush1.msra.mxu0 %v333
        %453 = vmatprep.subr.mxu0 %v338
        %454 = vmatpush1.msra.mxu0 %v337
        %455 = vmatprep.subr.mxu0 %v342
        %456 = vmatpush1.msra.mxu0 %v341
        %457 = vmatprep.subr.mxu0 %v346
        %458 = vmatpush1.msra.mxu0 %v345
        %459 = vmatprep.subr.mxu0 %v350
        %460 = vmatpush1.msra.mxu0 %v349
        %461 = vmatprep.subr.mxu0 %v354
        %462 = vmatpush1.msra.mxu0 %v353
        %463 = vmatprep.subr.mxu0 %v358
        %464 = vmatpush1.msra.mxu0 %v357
        %465 = vmatprep.subr.mxu0 %v362
        %466 = vmatpush1.msra.mxu0 %v361
        %467 = vmatprep.subr.mxu0 %v366
        %468 = vmatpush1.msra.mxu0 %v365
        %469 = vmatprep.subr.mxu0 %v370
        %470 = vmatpush1.msra.mxu0 %v369
        %471 = vmatprep.subr.mxu0 %v374
        %472 = vmatpush1.msra.mxu0 %v373
        %473 = vmatprep.subr.mxu0 %v378
        %474 = vmatpush1.msra.mxu0 %v377
        %475 = vmatprep.subr.mxu0 %v382
        %476 = vmatpush1.msra.mxu0 %v381
        %477 = vmatprep.subr.mxu0 %v386
        %478 = vmatpush1.msra.mxu0 %v385
        %479 = vmatprep.subr.mxu0 %v390
        %480 = vmatpush1.msra.mxu0 %v389
        %481 = vmatprep.subr.mxu0 %v394
        %482 = vmatpush1.msra.mxu0 %v393
        %483 = vmatprep.subr.mxu0 %v398
        %484 = vmatpush1.msra.mxu0 %v397
        %485 = vmatprep.subr.mxu0 %v402
        %486 = vmatpush1.msra.mxu0 %v401
        %487 = vmatprep.subr.mxu0 %v406
        %488 = vmatpush1.msra.mxu0 %v405
        %489 = vmatprep.subr.mxu0 %v410
        %490 = vmatpush1.msra.mxu0 %v409
        %491 = vmatprep.subr.mxu0 %v414
        %492 = vmatpush1.msra.mxu0 %v413
        %493 = vmatprep.subr.mxu0 %v418
        %494 = vmatpush1.msra.mxu0 %v417
        %495 = vmatprep.subr.mxu0 %v422
        %496 = vmatpush1.msra.mxu0 %v421
        %497 = vmatprep.subr.mxu0 %v426
        %498 = vmatpush1.msra.mxu0 %v425
        %499 = vmatprep.subr.mxu0 %v430
        %500 = vmatpush1.msra.mxu0 %v429
        %501 = vmatprep.subr.mxu0 %v434
        %502 = vmatpush1.msra.mxu0 %v433
        %503 = vmatprep.subr.mxu0 %v438
        %504 = vmatpush1.msra.mxu0 %v437
        %505 = vmatprep.mubr.f32.mxu0 %v282
        %506 = vmatmul.mubr.f32.gmra.mrb[0].mxu0 %v281
        %v507 = vpop.f32.mrb[0].mxu0
        %v508 = vadd.f32 0.0, %v507
        %v509 = vpop.f32.mrb[0].mxu0
        %v510 = vadd.f32 0.0, %v509
        %511 = vmatprep.mubr.f32.mxu0 %v284
        %512 = vmatmul.mubr.f32.gmra.mrb[0].mxu0 %v283
        %v513 = vpop.f32.mrb[0].mxu0
        %v514 = vadd.f32 0.0, %v513
        %v515 = vpop.f32.mrb[0].mxu0
        %v516 = vadd.f32 0.0, %v515
        %517 = vmatprep.mubr.f32.mxu0 %v286
        %518 = vmatmul.mubr.f32.gmra.mrb[0].mxu0 %v285
        %v519 = vpop.f32.mrb[0].mxu0
        %v520 = vadd.f32 0.0, %v519
        %v521 = vpop.f32.mrb[0].mxu0
        %v522 = vadd.f32 0.0, %v521
        %523 = vmatprep.mubr.f32.mxu0 %v288
        %524 = vmatmul.mubr.f32.gmra.mrb[0].mxu0 %v287
        %v525 = vpop.f32.mrb[0].mxu0
        %v526 = vadd.f32 0.0, %v525
        %v527 = vpop.f32.mrb[0].mxu0
        %v528 = vadd.f32 0.0, %v527
        %529 = vmatprep.mubr.f32.mxu0 %v290
        %530 = vmatmul.mubr.f32.gmra.mrb[0].mxu0 %v289
        %v531 = vpop.f32.mrb[0].mxu0
        %v532 = vadd.f32 0.0, %v531
        %v533 = vpop.f32.mrb[0].mxu0
        %v534 = vadd.f32 0.0, %v533
        %535 = vmatprep.mubr.f32.mxu0 %v292
        %536 = vmatmul.mubr.f32.gmra.mrb[0].mxu0 %v291
        %v537 = vpop.f32.mrb[0].mxu0
        %v538 = vadd.f32 0.0, %v537
        %v539 = vpop.f32.mrb[0].mxu0
        %v540 = vadd.f32 0.0, %v539
        %541 = vmatprep.mubr.f32.mxu0 %v294
        %542 = vmatmul.mubr.f32.gmra.mrb[0].mxu0 %v293
        %v543 = vpop.f32.mrb[0].mxu0
        %v544 = vadd.f32 0.0, %v543
        %v545 = vpop.f32.mrb[0].mxu0
        %v546 = vadd.f32 0.0, %v545
        %547 = vmatprep.mubr.f32.mxu0 %v296
        %548 = vmatmul.mubr.f32.gmra.mrb[0].mxu0 %v295
        %v549 = vpop.f32.mrb[0].mxu0
        %v550 = vadd.f32 0.0, %v549
        %v551 = vpop.f32.mrb[0].mxu0
        %v552 = vadd.f32 0.0, %v551
        %553 = vmatprep.mubr.f32.mxu0 %v298
        %554 = vmatmul.mubr.f32.gmra.mrb[0].mxu0 %v297
        %v555 = vpop.f32.mrb[0].mxu0
        %v556 = vadd.f32 0.0, %v555
        %v557 = vpop.f32.mrb[0].mxu0
        %v558 = vadd.f32 0.0, %v557
        %559 = vmatprep.mubr.f32.mxu0 %v300
        %560 = vmatmul.mubr.f32.gmra.mrb[0].mxu0 %v299
        %v561 = vpop.f32.mrb[0].mxu0
        %v562 = vadd.f32 0.0, %v561
        %v563 = vpop.f32.mrb[0].mxu0
        %v564 = vadd.f32 0.0, %v563
        %565 = vmatprep.mubr.f32.mxu0 %v302
        %566 = vmatmul.mubr.f32.gmra.mrb[0].mxu0 %v301
        %v567 = vpop.f32.mrb[0].mxu0
        %v568 = vadd.f32 0.0, %v567
        %v569 = vpop.f32.mrb[0].mxu0
        %v570 = vadd.f32 0.0, %v569
        %571 = vmatprep.mubr.f32.mxu0 %v304
        %572 = vmatmul.mubr.f32.gmra.mrb[0].mxu0 %v303
        %v573 = vpop.f32.mrb[0].mxu0
        %v574 = vadd.f32 0.0, %v573
        %v575 = vpop.f32.mrb[0].mxu0
        %v576 = vadd.f32 0.0, %v575
        %577 = vmatprep.mubr.f32.mxu0 %v306
        %578 = vmatmul.mubr.f32.gmra.mrb[0].mxu0 %v305
        %v579 = vpop.f32.mrb[0].mxu0
        %v580 = vadd.f32 0.0, %v579
        %v581 = vpop.f32.mrb[0].mxu0
        %v582 = vadd.f32 0.0, %v581
        %583 = vmatprep.mubr.f32.mxu0 %v308
        %584 = vmatmul.mubr.f32.gmra.mrb[0].mxu0 %v307
        %v585 = vpop.f32.mrb[0].mxu0
        %v586 = vadd.f32 0.0, %v585
        %v587 = vpop.f32.mrb[0].mxu0
        %v588 = vadd.f32 0.0, %v587
        %589 = vmatprep.mubr.f32.mxu0 %v310
        %590 = vmatmul.mubr.f32.gmra.mrb[0].mxu0 %v309
        %v591 = vpop.f32.mrb[0].mxu0
        %v592 = vadd.f32 0.0, %v591
        %v593 = vpop.f32.mrb[0].mxu0
        %v594 = vadd.f32 0.0, %v593
        %595 = vmatprep.mubr.f32.mxu0 %v312
        %596 = vmatmul.mubr.f32.gmra.mrb[0].mxu0 %v311
        %v597 = vpop.f32.mrb[0].mxu0
        %v598 = vadd.f32 0.0, %v597
        %v599 = vpop.f32.mrb[0].mxu0
        %v600 = vadd.f32 0.0, %v599
        %601 = vdwg.mxu0
        %602 = vmatprep.subr.mxu0 %v316
        %603 = vmatpush1.msra.mxu0 %v315
        %604 = vmatprep.subr.mxu0 %v320
        %605 = vmatpush1.msra.mxu0 %v319
        %606 = vmatprep.subr.mxu0 %v324
        %607 = vmatpush1.msra.mxu0 %v323
        %608 = vmatprep.subr.mxu0 %v328
        %609 = vmatpush1.msra.mxu0 %v327
        %610 = vmatprep.subr.mxu0 %v332
        %611 = vmatpush1.msra.mxu0 %v331
        %612 = vmatprep.subr.mxu0 %v336
        %613 = vmatpush1.msra.mxu0 %v335
        %614 = vmatprep.subr.mxu0 %v340
        %615 = vmatpush1.msra.mxu0 %v339
        %616 = vmatprep.subr.mxu0 %v344
        %617 = vmatpush1.msra.mxu0 %v343
        %618 = vmatprep.subr.mxu0 %v348
        %619 = vmatpush1.msra.mxu0 %v347
        %620 = vmatprep.subr.mxu0 %v352
        %621 = vmatpush1.msra.mxu0 %v351
        %622 = vmatprep.subr.mxu0 %v356
        %623 = vmatpush1.msra.mxu0 %v355
        %624 = vmatprep.subr.mxu0 %v360
        %625 = vmatpush1.msra.mxu0 %v359
        %626 = vmatprep.subr.mxu0 %v364
        %627 = vmatpush1.msra.mxu0 %v363
        %628 = vmatprep.subr.mxu0 %v368
        %629 = vmatpush1.msra.mxu0 %v367
        %630 = vmatprep.subr.mxu0 %v372
        %631 = vmatpush1.msra.mxu0 %v371
        %632 = vmatprep.subr.mxu0 %v376
        %633 = vmatpush1.msra.mxu0 %v375
        %634 = vmatprep.subr.mxu0 %v380
        %635 = vmatpush1.msra.mxu0 %v379
        %636 = vmatprep.subr.mxu0 %v384
        %637 = vmatpush1.msra.mxu0 %v383
        %638 = vmatprep.subr.mxu0 %v388
        %639 = vmatpush1.msra.mxu0 %v387
        %640 = vmatprep.subr.mxu0 %v392
        %641 = vmatpush1.msra.mxu0 %v391
        %642 = vmatprep.subr.mxu0 %v396
        %643 = vmatpush1.msra.mxu0 %v395
        %644 = vmatprep.subr.mxu0 %v400
        %645 = vmatpush1.msra.mxu0 %v399
        %646 = vmatprep.subr.mxu0 %v404
        %647 = vmatpush1.msra.mxu0 %v403
        %648 = vmatprep.subr.mxu0 %v408
        %649 = vmatpush1.msra.mxu0 %v407
        %650 = vmatprep.subr.mxu0 %v412
        %651 = vmatpush1.msra.mxu0 %v411
        %652 = vmatprep.subr.mxu0 %v416
        %653 = vmatpush1.msra.mxu0 %v415
        %654 = vmatprep.subr.mxu0 %v420
        %655 = vmatpush1.msra.mxu0 %v419
        %656 = vmatprep.subr.mxu0 %v424
        %657 = vmatpush1.msra.mxu0 %v423
        %658 = vmatprep.subr.mxu0 %v428
        %659 = vmatpush1.msra.mxu0 %v427
        %660 = vmatprep.subr.mxu0 %v432
        %661 = vmatpush1.msra.mxu0 %v431
        %662 = vmatprep.subr.mxu0 %v436
        %663 = vmatpush1.msra.mxu0 %v435
        %664 = vmatprep.subr.mxu0 %v440
        %665 = vmatpush1.msra.mxu0 %v439
        %666 = vmatprep.mubr.f32.mxu0 %v282
        %667 = vmatmul.mubr.f32.gmra.mrb[0].mxu0 %v281
        %v668 = vpop.f32.mrb[0].mxu0
        %v669 = vadd.f32 0.0, %v668
        %v670 = vpop.f32.mrb[0].mxu0
        %v671 = vadd.f32 0.0, %v670
        %672 = vmatprep.mubr.f32.mxu0 %v284
        %673 = vmatmul.mubr.f32.gmra.mrb[0].mxu0 %v283
        %v674 = vpop.f32.mrb[0].mxu0
        %v675 = vadd.f32 0.0, %v674
        %v676 = vpop.f32.mrb[0].mxu0
        %v677 = vadd.f32 0.0, %v676
        %678 = vmatprep.mubr.f32.mxu0 %v286
        %679 = vmatmul.mubr.f32.gmra.mrb[0].mxu0 %v285
        %v680 = vpop.f32.mrb[0].mxu0
        %v681 = vadd.f32 0.0, %v680
        %v682 = vpop.f32.mrb[0].mxu0
        %v683 = vadd.f32 0.0, %v682
        %684 = vmatprep.mubr.f32.mxu0 %v288
        %685 = vmatmul.mubr.f32.gmra.mrb[0].mxu0 %v287
        %v686 = vpop.f32.mrb[0].mxu0
        %v687 = vadd.f32 0.0, %v686
        %v688 = vpop.f32.mrb[0].mxu0
        %v689 = vadd.f32 0.0, %v688
        %690 = vmatprep.mubr.f32.mxu0 %v290
        %691 = vmatmul.mubr.f32.gmra.mrb[0].mxu0 %v289
        %v692 = vpop.f32.mrb[0].mxu0
        %v693 = vadd.f32 0.0, %v692
        %v694 = vpop.f32.mrb[0].mxu0
        %v695 = vadd.f32 0.0, %v694
        %696 = vmatprep.mubr.f32.mxu0 %v292
        %697 = vmatmul.mubr.f32.gmra.mrb[0].mxu0 %v291
        %v698 = vpop.f32.mrb[0].mxu0
        %v699 = vadd.f32 0.0, %v698
        %v700 = vpop.f32.mrb[0].mxu0
        %v701 = vadd.f32 0.0, %v700
        %702 = vmatprep.mubr.f32.mxu0 %v294
        %703 = vmatmul.mubr.f32.gmra.mrb[0].mxu0 %v293
        %v704 = vpop.f32.mrb[0].mxu0
        %v705 = vadd.f32 0.0, %v704
        %v706 = vpop.f32.mrb[0].mxu0
        %v707 = vadd.f32 0.0, %v706
        %708 = vmatprep.mubr.f32.mxu0 %v296
        %709 = vmatmul.mubr.f32.gmra.mrb[0].mxu0 %v295
        %v710 = vpop.f32.mrb[0].mxu0
        %v711 = vadd.f32 0.0, %v710
        %v712 = vpop.f32.mrb[0].mxu0
        %v713 = vadd.f32 0.0, %v712
        %714 = vmatprep.mubr.f32.mxu0 %v298
        %715 = vmatmul.mubr.f32.gmra.mrb[0].mxu0 %v297
        %v716 = vpop.f32.mrb[0].mxu0
        %v717 = vadd.f32 0.0, %v716
        %v718 = vpop.f32.mrb[0].mxu0
        %v719 = vadd.f32 0.0, %v718
        %720 = vmatprep.mubr.f32.mxu0 %v300
        %721 = vmatmul.mubr.f32.gmra.mrb[0].mxu0 %v299
        %v722 = vpop.f32.mrb[0].mxu0
        %v723 = vadd.f32 0.0, %v722
        %v724 = vpop.f32.mrb[0].mxu0
        %v725 = vadd.f32 0.0, %v724
        %726 = vmatprep.mubr.f32.mxu0 %v302
        %727 = vmatmul.mubr.f32.gmra.mrb[0].mxu0 %v301
        %v728 = vpop.f32.mrb[0].mxu0
        %v729 = vadd.f32 0.0, %v728
        %v730 = vpop.f32.mrb[0].mxu0
        %v731 = vadd.f32 0.0, %v730
        %732 = vmatprep.mubr.f32.mxu0 %v304
        %733 = vmatmul.mubr.f32.gmra.mrb[0].mxu0 %v303
        %v734 = vpop.f32.mrb[0].mxu0
        %v735 = vadd.f32 0.0, %v734
        %v736 = vpop.f32.mrb[0].mxu0
        %v737 = vadd.f32 0.0, %v736
        %738 = vmatprep.mubr.f32.mxu0 %v306
        %739 = vmatmul.mubr.f32.gmra.mrb[0].mxu0 %v305
        %v740 = vpop.f32.mrb[0].mxu0
        %v741 = vadd.f32 0.0, %v740
        %v742 = vpop.f32.mrb[0].mxu0
        %v743 = vadd.f32 0.0, %v742
        %744 = vmatprep.mubr.f32.mxu0 %v308
        %745 = vmatmul.mubr.f32.gmra.mrb[0].mxu0 %v307
        %v746 = vpop.f32.mrb[0].mxu0
        %v747 = vadd.f32 0.0, %v746
        %v748 = vpop.f32.mrb[0].mxu0
        %v749 = vadd.f32 0.0, %v748
        %750 = vmatprep.mubr.f32.mxu0 %v310
        %751 = vmatmul.mubr.f32.gmra.mrb[0].mxu0 %v309
        %v752 = vpop.f32.mrb[0].mxu0
        %v753 = vadd.f32 0.0, %v752
        %v754 = vpop.f32.mrb[0].mxu0
        %v755 = vadd.f32 0.0, %v754
        %756 = vmatprep.mubr.f32.mxu0 %v312
        %757 = vmatmul.mubr.f32.gmra.mrb[0].mxu0 %v311
        %v758 = vpop.f32.mrb[0].mxu0
        %v759 = vadd.f32 0.0, %v758
        %v760 = vpop.f32.mrb[0].mxu0
        %v761 = vadd.f32 0.0, %v760
        %762 = vdwg.mxu0
        %v763 = vxor.u32 %v508, 2147483648
        %v764 = vxor.u32 %v510, 2147483648
        %v765 = vxor.u32 %v514, 2147483648
        %v766 = vxor.u32 %v516, 2147483648
        %v767 = vxor.u32 %v520, 2147483648
        %v768 = vxor.u32 %v522, 2147483648
        %v769 = vxor.u32 %v526, 2147483648
        %v770 = vxor.u32 %v528, 2147483648
        %v771 = vxor.u32 %v532, 2147483648
        %v772 = vxor.u32 %v534, 2147483648
        %v773 = vxor.u32 %v538, 2147483648
        %v774 = vxor.u32 %v540, 2147483648
        %v775 = vxor.u32 %v544, 2147483648
        %v776 = vxor.u32 %v546, 2147483648
        %v777 = vxor.u32 %v550, 2147483648
        %v778 = vxor.u32 %v552, 2147483648
        %v779 = vxor.u32 %v556, 2147483648
        %v780 = vxor.u32 %v558, 2147483648
        %v781 = vxor.u32 %v562, 2147483648
        %v782 = vxor.u32 %v564, 2147483648
        %v783 = vxor.u32 %v568, 2147483648
        %v784 = vxor.u32 %v570, 2147483648
        %v785 = vxor.u32 %v574, 2147483648
        %v786 = vxor.u32 %v576, 2147483648
        %v787 = vxor.u32 %v580, 2147483648
        %v788 = vxor.u32 %v582, 2147483648
        %v789 = vxor.u32 %v586, 2147483648
        %v790 = vxor.u32 %v588, 2147483648
        %v791 = vxor.u32 %v592, 2147483648
        %v792 = vxor.u32 %v594, 2147483648
        %v793 = vxor.u32 %v598, 2147483648
        %v794 = vxor.u32 %v600, 2147483648
        %v795 = vmul.f32 %v763, 1.442695
        %v796 = vpow.pop %v795
        %v797 = vmul.f32 %v764, 1.442695
        %v798 = vpow.pop %v797
        %v799 = vmul.f32 %v765, 1.442695
        %v800 = vpow.pop %v799
        %v801 = vmul.f32 %v766, 1.442695
        %v802 = vpow.pop %v801
        %v803 = vmul.f32 %v767, 1.442695
        %v804 = vpow.pop %v803
        %v805 = vmul.f32 %v768, 1.442695
        %v806 = vpow.pop %v805
        %v807 = vmul.f32 %v769, 1.442695
        %v808 = vpow.pop %v807
        %v809 = vmul.f32 %v770, 1.442695
        %v810 = vpow.pop %v809
        %v811 = vmul.f32 %v771, 1.442695
        %v812 = vpow.pop %v811
        %v813 = vmul.f32 %v772, 1.442695
        %v814 = vpow.pop %v813
        %v815 = vmul.f32 %v773, 1.442695
        %v816 = vpow.pop %v815
        %v817 = vmul.f32 %v774, 1.442695
        %v818 = vpow.pop %v817
        %v819 = vmul.f32 %v775, 1.442695
        %v820 = vpow.pop %v819
        %v821 = vmul.f32 %v776, 1.442695
        %v822 = vpow.pop %v821
        %v823 = vmul.f32 %v777, 1.442695
        %v824 = vpow.pop %v823
        %v825 = vmul.f32 %v778, 1.442695
        %v826 = vpow.pop %v825
        %v827 = vmul.f32 %v779, 1.442695
        %v828 = vpow.pop %v827
        %v829 = vmul.f32 %v780, 1.442695
        %v830 = vpow.pop %v829
        %v831 = vmul.f32 %v781, 1.442695
        %v832 = vpow.pop %v831
        %v833 = vmul.f32 %v782, 1.442695
        %v834 = vpow.pop %v833
        %v835 = vmul.f32 %v783, 1.442695
        %v836 = vpow.pop %v835
        %v837 = vmul.f32 %v784, 1.442695
        %v838 = vpow.pop %v837
        %v839 = vmul.f32 %v785, 1.442695
        %v840 = vpow.pop %v839
        %v841 = vmul.f32 %v786, 1.442695
        %v842 = vpow.pop %v841
        %v843 = vmul.f32 %v787, 1.442695
        %v844 = vpow.pop %v843
        %v845 = vmul.f32 %v788, 1.442695
        %v846 = vpow.pop %v845
        %v847 = vmul.f32 %v789, 1.442695
        %v848 = vpow.pop %v847
        %v849 = vmul.f32 %v790, 1.442695
        %v850 = vpow.pop %v849
        %v851 = vmul.f32 %v791, 1.442695
        %v852 = vpow.pop %v851
        %v853 = vmul.f32 %v792, 1.442695
        %v854 = vpow.pop %v853
        %v855 = vmul.f32 %v793, 1.442695
        %v856 = vpow.pop %v855
        %v857 = vmul.f32 %v794, 1.442695
        %v858 = vpow.pop %v857
        %v859 = vadd.f32 %v796, 1.0
        %v860 = vadd.f32 %v798, 1.0
        %v861 = vadd.f32 %v800, 1.0
        %v862 = vadd.f32 %v802, 1.0
        %v863 = vadd.f32 %v804, 1.0
        %v864 = vadd.f32 %v806, 1.0
        %v865 = vadd.f32 %v808, 1.0
        %v866 = vadd.f32 %v810, 1.0
        %v867 = vadd.f32 %v812, 1.0
        %v868 = vadd.f32 %v814, 1.0
        %v869 = vadd.f32 %v816, 1.0
        %v870 = vadd.f32 %v818, 1.0
        %v871 = vadd.f32 %v820, 1.0
        %v872 = vadd.f32 %v822, 1.0
        %v873 = vadd.f32 %v824, 1.0
        %v874 = vadd.f32 %v826, 1.0
        %v875 = vadd.f32 %v828, 1.0
        %v876 = vadd.f32 %v830, 1.0
        %v877 = vadd.f32 %v832, 1.0
        %v878 = vadd.f32 %v834, 1.0
        %v879 = vadd.f32 %v836, 1.0
        %v880 = vadd.f32 %v838, 1.0
        %v881 = vadd.f32 %v840, 1.0
        %v882 = vadd.f32 %v842, 1.0
        %v883 = vadd.f32 %v844, 1.0
        %v884 = vadd.f32 %v846, 1.0
        %v885 = vadd.f32 %v848, 1.0
        %v886 = vadd.f32 %v850, 1.0
        %v887 = vadd.f32 %v852, 1.0
        %v888 = vadd.f32 %v854, 1.0
        %v889 = vadd.f32 %v856, 1.0
        %v890 = vadd.f32 %v858, 1.0
        %v891 = vrcp.pop %v859
        %v892 = vmul.f32 1.0, %v891
        %v893 = vrcp.pop %v860
        %v894 = vmul.f32 1.0, %v893
        %v895 = vrcp.pop %v861
        %v896 = vmul.f32 1.0, %v895
        %v897 = vrcp.pop %v862
        %v898 = vmul.f32 1.0, %v897
        %v899 = vrcp.pop %v863
        %v900 = vmul.f32 1.0, %v899
        %v901 = vrcp.pop %v864
        %v902 = vmul.f32 1.0, %v901
        %v903 = vrcp.pop %v865
        %v904 = vmul.f32 1.0, %v903
        %v905 = vrcp.pop %v866
        %v906 = vmul.f32 1.0, %v905
        %v907 = vrcp.pop %v867
        %v908 = vmul.f32 1.0, %v907
        %v909 = vrcp.pop %v868
        %v910 = vmul.f32 1.0, %v909
        %v911 = vrcp.pop %v869
        %v912 = vmul.f32 1.0, %v911
        %v913 = vrcp.pop %v870
        %v914 = vmul.f32 1.0, %v913
        %v915 = vrcp.pop %v871
        %v916 = vmul.f32 1.0, %v915
        %v917 = vrcp.pop %v872
        %v918 = vmul.f32 1.0, %v917
        %v919 = vrcp.pop %v873
        %v920 = vmul.f32 1.0, %v919
        %v921 = vrcp.pop %v874
        %v922 = vmul.f32 1.0, %v921
        %v923 = vrcp.pop %v875
        %v924 = vmul.f32 1.0, %v923
        %v925 = vrcp.pop %v876
        %v926 = vmul.f32 1.0, %v925
        %v927 = vrcp.pop %v877
        %v928 = vmul.f32 1.0, %v927
        %v929 = vrcp.pop %v878
        %v930 = vmul.f32 1.0, %v929
        %v931 = vrcp.pop %v879
        %v932 = vmul.f32 1.0, %v931
        %v933 = vrcp.pop %v880
        %v934 = vmul.f32 1.0, %v933
        %v935 = vrcp.pop %v881
        %v936 = vmul.f32 1.0, %v935
        %v937 = vrcp.pop %v882
        %v938 = vmul.f32 1.0, %v937
        %v939 = vrcp.pop %v883
        %v940 = vmul.f32 1.0, %v939
        %v941 = vrcp.pop %v884
        %v942 = vmul.f32 1.0, %v941
        %v943 = vrcp.pop %v885
        %v944 = vmul.f32 1.0, %v943
        %v945 = vrcp.pop %v886
        %v946 = vmul.f32 1.0, %v945
        %v947 = vrcp.pop %v887
        %v948 = vmul.f32 1.0, %v947
        %v949 = vrcp.pop %v888
        %v950 = vmul.f32 1.0, %v949
        %v951 = vrcp.pop %v889
        %v952 = vmul.f32 1.0, %v951
        %v953 = vrcp.pop %v890
        %v954 = vmul.f32 1.0, %v953
        %v955 = vmul.f32 %v508, %v892
        %v956 = vmul.f32 %v510, %v894
        %v957 = vmul.f32 %v514, %v896
        %v958 = vmul.f32 %v516, %v898
        %v959 = vmul.f32 %v520, %v900
        %v960 = vmul.f32 %v522, %v902
        %v961 = vmul.f32 %v526, %v904
        %v962 = vmul.f32 %v528, %v906
        %v963 = vmul.f32 %v532, %v908
        %v964 = vmul.f32 %v534, %v910
        %v965 = vmul.f32 %v538, %v912
        %v966 = vmul.f32 %v540, %v914
        %v967 = vmul.f32 %v544, %v916
        %v968 = vmul.f32 %v546, %v918
        %v969 = vmul.f32 %v550, %v920
        %v970 = vmul.f32 %v552, %v922
        %v971 = vmul.f32 %v556, %v924
        %v972 = vmul.f32 %v558, %v926
        %v973 = vmul.f32 %v562, %v928
        %v974 = vmul.f32 %v564, %v930
        %v975 = vmul.f32 %v568, %v932
        %v976 = vmul.f32 %v570, %v934
        %v977 = vmul.f32 %v574, %v936
        %v978 = vmul.f32 %v576, %v938
        %v979 = vmul.f32 %v580, %v940
        %v980 = vmul.f32 %v582, %v942
        %v981 = vmul.f32 %v586, %v944
        %v982 = vmul.f32 %v588, %v946
        %v983 = vmul.f32 %v592, %v948
        %v984 = vmul.f32 %v594, %v950
        %v985 = vmul.f32 %v598, %v952
        %v986 = vmul.f32 %v600, %v954
        %v987 = vmul.f32 %v955, %v669
        %v988 = vmul.f32 %v956, %v671
        %v989 = vmul.f32 %v957, %v675
        %v990 = vmul.f32 %v958, %v677
        %v991 = vmul.f32 %v959, %v681
        %v992 = vmul.f32 %v960, %v683
        %v993 = vmul.f32 %v961, %v687
        %v994 = vmul.f32 %v962, %v689
        %v995 = vmul.f32 %v963, %v693
        %v996 = vmul.f32 %v964, %v695
        %v997 = vmul.f32 %v965, %v699
        %v998 = vmul.f32 %v966, %v701
        %v999 = vmul.f32 %v967, %v705
        %v1000 = vmul.f32 %v968, %v707
        %v1001 = vmul.f32 %v969, %v711
        %v1002 = vmul.f32 %v970, %v713
        %v1003 = vmul.f32 %v971, %v717
        %v1004 = vmul.f32 %v972, %v719
        %v1005 = vmul.f32 %v973, %v723
        %v1006 = vmul.f32 %v974, %v725
        %v1007 = vmul.f32 %v975, %v729
        %v1008 = vmul.f32 %v976, %v731
        %v1009 = vmul.f32 %v977, %v735
        %v1010 = vmul.f32 %v978, %v737
        %v1011 = vmul.f32 %v979, %v741
        %v1012 = vmul.f32 %v980, %v743
        %v1013 = vmul.f32 %v981, %v747
        %v1014 = vmul.f32 %v982, %v749
        %v1015 = vmul.f32 %v983, %v753
        %v1016 = vmul.f32 %v984, %v755
        %v1017 = vmul.f32 %v985, %v759
        %v1018 = vmul.f32 %v986, %v761
        %v1019 = vld [vmem:[%s246] sm:$0xff]
        %v1020 = vld [vmem:[%s246 + $0x8] sm:$0xff]
        %v1021 = vld [vmem:[%s246 + $0x10] sm:$0xff]
        %v1022 = vld [vmem:[%s246 + $0x18] sm:$0xff]
        %v1023 = vld [vmem:[%s246 + $0x20] sm:$0xff]
        %v1024 = vld [vmem:[%s246 + $0x28] sm:$0xff]
        %v1025 = vld [vmem:[%s246 + $0x30] sm:$0xff]
        %v1026 = vld [vmem:[%s246 + $0x38] sm:$0xff]
        %v1027 = vld [vmem:[%s246 + $0x40] sm:$0xff]
        %v1028 = vld [vmem:[%s246 + $0x48] sm:$0xff]
        %v1029 = vld [vmem:[%s246 + $0x50] sm:$0xff]
        %v1030 = vld [vmem:[%s246 + $0x58] sm:$0xff]
        %v1031 = vld [vmem:[%s246 + $0x60] sm:$0xff]
        %v1032 = vld [vmem:[%s246 + $0x68] sm:$0xff]
        %v1033 = vld [vmem:[%s246 + $0x70] sm:$0xff]
        %v1034 = vld [vmem:[%s246 + $0x78] sm:$0xff]
        %v1035 = vld [vmem:[%s246 + $0x80] sm:$0xff]
        %v1036 = vld [vmem:[%s246 + $0x88] sm:$0xff]
        %v1037 = vld [vmem:[%s246 + $0x90] sm:$0xff]
        %v1038 = vld [vmem:[%s246 + $0x98] sm:$0xff]
        %v1039 = vld [vmem:[%s246 + $0xa0] sm:$0xff]
        %v1040 = vld [vmem:[%s246 + $0xa8] sm:$0xff]
        %v1041 = vld [vmem:[%s246 + $0xb0] sm:$0xff]
        %v1042 = vld [vmem:[%s246 + $0xb8] sm:$0xff]
        %v1043 = vld [vmem:[%s246 + $0xc0] sm:$0xff]
        %v1044 = vld [vmem:[%s246 + $0xc8] sm:$0xff]
        %v1045 = vld [vmem:[%s246 + $0xd0] sm:$0xff]
        %v1046 = vld [vmem:[%s246 + $0xd8] sm:$0xff]
        %v1047 = vld [vmem:[%s246 + $0xe0] sm:$0xff]
        %v1048 = vld [vmem:[%s246 + $0xe8] sm:$0xff]
        %v1049 = vld [vmem:[%s246 + $0xf0] sm:$0xff]
        %v1050 = vld [vmem:[%s246 + $0xf8] sm:$0xff]
        %v1051 = vld [vmem:[%s246 + $0x100] sm:$0xff]
        %v1052 = vld [vmem:[%s246 + $0x108] sm:$0xff]
        %v1053 = vld [vmem:[%s246 + $0x110] sm:$0xff]
        %v1054 = vld [vmem:[%s246 + $0x118] sm:$0xff]
        %v1055 = vld [vmem:[%s246 + $0x120] sm:$0xff]
        %v1056 = vld [vmem:[%s246 + $0x128] sm:$0xff]
        %v1057 = vld [vmem:[%s246 + $0x130] sm:$0xff]
        %v1058 = vld [vmem:[%s246 + $0x138] sm:$0xff]
        %v1059 = vld [vmem:[%s246 + $0x140] sm:$0xff]
        %v1060 = vld [vmem:[%s246 + $0x148] sm:$0xff]
        %v1061 = vld [vmem:[%s246 + $0x150] sm:$0xff]
        %v1062 = vld [vmem:[%s246 + $0x158] sm:$0xff]
        %v1063 = vld [vmem:[%s246 + $0x160] sm:$0xff]
        %v1064 = vld [vmem:[%s246 + $0x168] sm:$0xff]
        %v1065 = vld [vmem:[%s246 + $0x170] sm:$0xff]
        %v1066 = vld [vmem:[%s246 + $0x178] sm:$0xff]
        %v1067 = vld [vmem:[%s246 + $0x180] sm:$0xff]
        %v1068 = vld [vmem:[%s246 + $0x188] sm:$0xff]
        %v1069 = vld [vmem:[%s246 + $0x190] sm:$0xff]
        %v1070 = vld [vmem:[%s246 + $0x198] sm:$0xff]
        %v1071 = vld [vmem:[%s246 + $0x1a0] sm:$0xff]
        %v1072 = vld [vmem:[%s246 + $0x1a8] sm:$0xff]
        %v1073 = vld [vmem:[%s246 + $0x1b0] sm:$0xff]
        %v1074 = vld [vmem:[%s246 + $0x1b8] sm:$0xff]
        %v1075 = vld [vmem:[%s246 + $0x1c0] sm:$0xff]
        %v1076 = vld [vmem:[%s246 + $0x1c8] sm:$0xff]
        %v1077 = vld [vmem:[%s246 + $0x1d0] sm:$0xff]
        %v1078 = vld [vmem:[%s246 + $0x1d8] sm:$0xff]
        %v1079 = vld [vmem:[%s246 + $0x1e0] sm:$0xff]
        %v1080 = vld [vmem:[%s246 + $0x1e8] sm:$0xff]
        %v1081 = vld [vmem:[%s246 + $0x1f0] sm:$0xff]
        %v1082 = vld [vmem:[%s246 + $0x1f8] sm:$0xff]
        %1083 = vmatprep.subr.mxu0 %v1020
        %1084 = vmatpush1.msra.mxu0 %v1019
        %1085 = vmatprep.subr.mxu0 %v1022
        %1086 = vmatpush1.msra.mxu0 %v1021
        %1087 = vmatprep.subr.mxu0 %v1024
        %1088 = vmatpush1.msra.mxu0 %v1023
        %1089 = vmatprep.subr.mxu0 %v1026
        %1090 = vmatpush1.msra.mxu0 %v1025
        %1091 = vmatprep.subr.mxu0 %v1028
        %1092 = vmatpush1.msra.mxu0 %v1027
        %1093 = vmatprep.subr.mxu0 %v1030
        %1094 = vmatpush1.msra.mxu0 %v1029
        %1095 = vmatprep.subr.mxu0 %v1032
        %1096 = vmatpush1.msra.mxu0 %v1031
        %1097 = vmatprep.subr.mxu0 %v1034
        %1098 = vmatpush1.msra.mxu0 %v1033
        %1099 = vmatprep.subr.mxu0 %v1036
        %1100 = vmatpush1.msra.mxu0 %v1035
        %1101 = vmatprep.subr.mxu0 %v1038
        %1102 = vmatpush1.msra.mxu0 %v1037
        %1103 = vmatprep.subr.mxu0 %v1040
        %1104 = vmatpush1.msra.mxu0 %v1039
        %1105 = vmatprep.subr.mxu0 %v1042
        %1106 = vmatpush1.msra.mxu0 %v1041
        %1107 = vmatprep.subr.mxu0 %v1044
        %1108 = vmatpush1.msra.mxu0 %v1043
        %1109 = vmatprep.subr.mxu0 %v1046
        %1110 = vmatpush1.msra.mxu0 %v1045
        %1111 = vmatprep.subr.mxu0 %v1048
        %1112 = vmatpush1.msra.mxu0 %v1047
        %1113 = vmatprep.subr.mxu0 %v1050
        %1114 = vmatpush1.msra.mxu0 %v1049
        %1115 = vmatprep.subr.mxu0 %v1052
        %1116 = vmatpush1.msra.mxu0 %v1051
        %1117 = vmatprep.subr.mxu0 %v1054
        %1118 = vmatpush1.msra.mxu0 %v1053
        %1119 = vmatprep.subr.mxu0 %v1056
        %1120 = vmatpush1.msra.mxu0 %v1055
        %1121 = vmatprep.subr.mxu0 %v1058
        %1122 = vmatpush1.msra.mxu0 %v1057
        %1123 = vmatprep.subr.mxu0 %v1060
        %1124 = vmatpush1.msra.mxu0 %v1059
        %1125 = vmatprep.subr.mxu0 %v1062
        %1126 = vmatpush1.msra.mxu0 %v1061
        %1127 = vmatprep.subr.mxu0 %v1064
        %1128 = vmatpush1.msra.mxu0 %v1063
        %1129 = vmatprep.subr.mxu0 %v1066
        %1130 = vmatpush1.msra.mxu0 %v1065
        %1131 = vmatprep.subr.mxu0 %v1068
        %1132 = vmatpush1.msra.mxu0 %v1067
        %1133 = vmatprep.subr.mxu0 %v1070
        %1134 = vmatpush1.msra.mxu0 %v1069
        %1135 = vmatprep.subr.mxu0 %v1072
        %1136 = vmatpush1.msra.mxu0 %v1071
        %1137 = vmatprep.subr.mxu0 %v1074
        %1138 = vmatpush1.msra.mxu0 %v1073
        %1139 = vmatprep.subr.mxu0 %v1076
        %1140 = vmatpush1.msra.mxu0 %v1075
        %1141 = vmatprep.subr.mxu0 %v1078
        %1142 = vmatpush1.msra.mxu0 %v1077
        %1143 = vmatprep.subr.mxu0 %v1080
        %1144 = vmatpush1.msra.mxu0 %v1079
        %1145 = vmatprep.subr.mxu0 %v1082
        %1146 = vmatpush1.msra.mxu0 %v1081
        %1147 = vmatprep.mubr.f32.mxu0 %v988
        %1148 = vmatmul.mubr.f32.gmra.mrb[0].mxu0 %v987
        %v1149 = vpop.f32.mrb[0].mxu0
        %v1150 = vadd.f32 0.0, %v1149
        %v1151 = vpop.f32.mrb[0].mxu0
        %v1152 = vadd.f32 0.0, %v1151
        %1153 = vmatprep.mubr.f32.mxu0 %v990
        %1154 = vmatmul.mubr.f32.gmra.mrb[0].mxu0 %v989
        %v1155 = vpop.f32.mrb[0].mxu0
        %v1156 = vadd.f32 0.0, %v1155
        %v1157 = vpop.f32.mrb[0].mxu0
        %v1158 = vadd.f32 0.0, %v1157
        %1159 = vmatprep.mubr.f32.mxu0 %v992
        %1160 = vmatmul.mubr.f32.gmra.mrb[0].mxu0 %v991
        %v1161 = vpop.f32.mrb[0].mxu0
        %v1162 = vadd.f32 0.0, %v1161
        %v1163 = vpop.f32.mrb[0].mxu0
        %v1164 = vadd.f32 0.0, %v1163
        %1165 = vmatprep.mubr.f32.mxu0 %v994
        %1166 = vmatmul.mubr.f32.gmra.mrb[0].mxu0 %v993
        %v1167 = vpop.f32.mrb[0].mxu0
        %v1168 = vadd.f32 0.0, %v1167
        %v1169 = vpop.f32.mrb[0].mxu0
        %v1170 = vadd.f32 0.0, %v1169
        %1171 = vmatprep.mubr.f32.mxu0 %v996
        %1172 = vmatmul.mubr.f32.gmra.mrb[0].mxu0 %v995
        %v1173 = vpop.f32.mrb[0].mxu0
        %v1174 = vadd.f32 0.0, %v1173
        %v1175 = vpop.f32.mrb[0].mxu0
        %v1176 = vadd.f32 0.0, %v1175
        %1177 = vmatprep.mubr.f32.mxu0 %v998
        %1178 = vmatmul.mubr.f32.gmra.mrb[0].mxu0 %v997
        %v1179 = vpop.f32.mrb[0].mxu0
        %v1180 = vadd.f32 0.0, %v1179
        %v1181 = vpop.f32.mrb[0].mxu0
        %v1182 = vadd.f32 0.0, %v1181
        %1183 = vmatprep.mubr.f32.mxu0 %v1000
        %1184 = vmatmul.mubr.f32.gmra.mrb[0].mxu0 %v999
        %v1185 = vpop.f32.mrb[0].mxu0
        %v1186 = vadd.f32 0.0, %v1185
        %v1187 = vpop.f32.mrb[0].mxu0
        %v1188 = vadd.f32 0.0, %v1187
        %1189 = vmatprep.mubr.f32.mxu0 %v1002
        %1190 = vmatmul.mubr.f32.gmra.mrb[0].mxu0 %v1001
        %v1191 = vpop.f32.mrb[0].mxu0
        %v1192 = vadd.f32 0.0, %v1191
        %v1193 = vpop.f32.mrb[0].mxu0
        %v1194 = vadd.f32 0.0, %v1193
        %1195 = vmatprep.mubr.f32.mxu0 %v1004
        %1196 = vmatmul.mubr.f32.gmra.mrb[0].mxu0 %v1003
        %v1197 = vpop.f32.mrb[0].mxu0
        %v1198 = vadd.f32 0.0, %v1197
        %v1199 = vpop.f32.mrb[0].mxu0
        %v1200 = vadd.f32 0.0, %v1199
        %1201 = vmatprep.mubr.f32.mxu0 %v1006
        %1202 = vmatmul.mubr.f32.gmra.mrb[0].mxu0 %v1005
        %v1203 = vpop.f32.mrb[0].mxu0
        %v1204 = vadd.f32 0.0, %v1203
        %v1205 = vpop.f32.mrb[0].mxu0
        %v1206 = vadd.f32 0.0, %v1205
        %1207 = vmatprep.mubr.f32.mxu0 %v1008
        %1208 = vmatmul.mubr.f32.gmra.mrb[0].mxu0 %v1007
        %v1209 = vpop.f32.mrb[0].mxu0
        %v1210 = vadd.f32 0.0, %v1209
        %v1211 = vpop.f32.mrb[0].mxu0
        %v1212 = vadd.f32 0.0, %v1211
        %1213 = vmatprep.mubr.f32.mxu0 %v1010
        %1214 = vmatmul.mubr.f32.gmra.mrb[0].mxu0 %v1009
        %v1215 = vpop.f32.mrb[0].mxu0
        %v1216 = vadd.f32 0.0, %v1215
        %v1217 = vpop.f32.mrb[0].mxu0
        %v1218 = vadd.f32 0.0, %v1217
        %1219 = vmatprep.mubr.f32.mxu0 %v1012
        %1220 = vmatmul.mubr.f32.gmra.mrb[0].mxu0 %v1011
        %v1221 = vpop.f32.mrb[0].mxu0
        %v1222 = vadd.f32 0.0, %v1221
        %v1223 = vpop.f32.mrb[0].mxu0
        %v1224 = vadd.f32 0.0, %v1223
        %1225 = vmatprep.mubr.f32.mxu0 %v1014
        %1226 = vmatmul.mubr.f32.gmra.mrb[0].mxu0 %v1013
        %v1227 = vpop.f32.mrb[0].mxu0
        %v1228 = vadd.f32 0.0, %v1227
        %v1229 = vpop.f32.mrb[0].mxu0
        %v1230 = vadd.f32 0.0, %v1229
        %1231 = vmatprep.mubr.f32.mxu0 %v1016
        %1232 = vmatmul.mubr.f32.gmra.mrb[0].mxu0 %v1015
        %v1233 = vpop.f32.mrb[0].mxu0
        %v1234 = vadd.f32 0.0, %v1233
        %v1235 = vpop.f32.mrb[0].mxu0
        %v1236 = vadd.f32 0.0, %v1235
        %1237 = vmatprep.mubr.f32.mxu0 %v1018
        %1238 = vmatmul.mubr.f32.gmra.mrb[0].mxu0 %v1017
        %v1239 = vpop.f32.mrb[0].mxu0
        %v1240 = vadd.f32 0.0, %v1239
        %v1241 = vpop.f32.mrb[0].mxu0
        %v1242 = vadd.f32 0.0, %v1241
        %1243 = vdwg.mxu0
        %p1244 = scmp.eq.s32.totalorder %s28, 0
        // Predicated region
        $region45: #{tpu_custom_call.1} parent=31 // pred_check
          %p1245 = pneg %p1244
        $region46: #{tpu_custom_call.1} parent=31 // pred_check_branch
          %1247 = sbr.rel (%p1245) target = $region48
        $region47: #{tpu_custom_call.1} parent=31 // pred_region
          %1248 = vst [vmem:[#allocation2] sm:$0xff] %v1150
          %1249 = vst [vmem:[#allocation2 + $0x8] sm:$0xff] %v1152
          %1250 = vst [vmem:[#allocation2 + $0x10] sm:$0xff] %v1156
          %1251 = vst [vmem:[#allocation2 + $0x18] sm:$0xff] %v1158
          %1252 = vst [vmem:[#allocation2 + $0x20] sm:$0xff] %v1162
          %1253 = vst [vmem:[#allocation2 + $0x28] sm:$0xff] %v1164
          %1254 = vst [vmem:[#allocation2 + $0x30] sm:$0xff] %v1168
          %1255 = vst [vmem:[#allocation2 + $0x38] sm:$0xff] %v1170
          %1256 = vst [vmem:[#allocation2 + $0x40] sm:$0xff] %v1174
          %1257 = vst [vmem:[#allocation2 + $0x48] sm:$0xff] %v1176
          %1258 = vst [vmem:[#allocation2 + $0x50] sm:$0xff] %v1180
          %1259 = vst [vmem:[#allocation2 + $0x58] sm:$0xff] %v1182
          %1260 = vst [vmem:[#allocation2 + $0x60] sm:$0xff] %v1186
          %1261 = vst [vmem:[#allocation2 + $0x68] sm:$0xff] %v1188
          %1262 = vst [vmem:[#allocation2 + $0x70] sm:$0xff] %v1192
          %1263 = vst [vmem:[#allocation2 + $0x78] sm:$0xff] %v1194
          %1264 = vst [vmem:[#allocation2 + $0x80] sm:$0xff] %v1198
          %1265 = vst [vmem:[#allocation2 + $0x88] sm:$0xff] %v1200
          %1266 = vst [vmem:[#allocation2 + $0x90] sm:$0xff] %v1204
          %1267 = vst [vmem:[#allocation2 + $0x98] sm:$0xff] %v1206
          %1268 = vst [vmem:[#allocation2 + $0xa0] sm:$0xff] %v1210
          %1269 = vst [vmem:[#allocation2 + $0xa8] sm:$0xff] %v1212
          %1270 = vst [vmem:[#allocation2 + $0xb0] sm:$0xff] %v1216
          %1271 = vst [vmem:[#allocation2 + $0xb8] sm:$0xff] %v1218
          %1272 = vst [vmem:[#allocation2 + $0xc0] sm:$0xff] %v1222
          %1273 = vst [vmem:[#allocation2 + $0xc8] sm:$0xff] %v1224
          %1274 = vst [vmem:[#allocation2 + $0xd0] sm:$0xff] %v1228
          %1275 = vst [vmem:[#allocation2 + $0xd8] sm:$0xff] %v1230
          %1276 = vst [vmem:[#allocation2 + $0xe0] sm:$0xff] %v1234
          %1277 = vst [vmem:[#allocation2 + $0xe8] sm:$0xff] %v1236
          %1278 = vst [vmem:[#allocation2 + $0xf0] sm:$0xff] %v1240
          %1279 = vst [vmem:[#allocation2 + $0xf8] sm:$0xff] %v1242
        $region48: #{tpu_custom_call.1} parent=31 // pred_fallthru
          _
        %p1280 = scmp.gt.s32.totalorder %s28, 0
        %p1281 = scmp.lt.s32.totalorder %s28, 1
        %p1282 = pnand %p1280, %p1281
        %p1283 = pneg %p1282
        // Predicated region
        $region49: #{tpu_custom_call.1} parent=31 // pred_check
          _
        $region50: #{tpu_custom_call.1} parent=31 // pred_check_branch
          %1285 = sbr.rel (%p1282) target = $region52
        $region51: #{tpu_custom_call.1} parent=31 // pred_region
          %v1286 = vld [vmem:[#allocation2] sm:$0xff]
          %v1287 = vld [vmem:[#allocation2 + $0x8] sm:$0xff]
          %v1288 = vld [vmem:[#allocation2 + $0x10] sm:$0xff]
          %v1289 = vld [vmem:[#allocation2 + $0x18] sm:$0xff]
          %v1290 = vld [vmem:[#allocation2 + $0x20] sm:$0xff]
          %v1291 = vld [vmem:[#allocation2 + $0x28] sm:$0xff]
          %v1292 = vld [vmem:[#allocation2 + $0x30] sm:$0xff]
          %v1293 = vld [vmem:[#allocation2 + $0x38] sm:$0xff]
          %v1294 = vld [vmem:[#allocation2 + $0x40] sm:$0xff]
          %v1295 = vld [vmem:[#allocation2 + $0x48] sm:$0xff]
          %v1296 = vld [vmem:[#allocation2 + $0x50] sm:$0xff]
          %v1297 = vld [vmem:[#allocation2 + $0x58] sm:$0xff]
          %v1298 = vld [vmem:[#allocation2 + $0x60] sm:$0xff]
          %v1299 = vld [vmem:[#allocation2 + $0x68] sm:$0xff]
          %v1300 = vld [vmem:[#allocation2 + $0x70] sm:$0xff]
          %v1301 = vld [vmem:[#allocation2 + $0x78] sm:$0xff]
          %v1302 = vld [vmem:[#allocation2 + $0x80] sm:$0xff]
          %v1303 = vld [vmem:[#allocation2 + $0x88] sm:$0xff]
          %v1304 = vld [vmem:[#allocation2 + $0x90] sm:$0xff]
          %v1305 = vld [vmem:[#allocation2 + $0x98] sm:$0xff]
          %v1306 = vld [vmem:[#allocation2 + $0xa0] sm:$0xff]
          %v1307 = vld [vmem:[#allocation2 + $0xa8] sm:$0xff]
          %v1308 = vld [vmem:[#allocation2 + $0xb0] sm:$0xff]
          %v1309 = vld [vmem:[#allocation2 + $0xb8] sm:$0xff]
          %v1310 = vld [vmem:[#allocation2 + $0xc0] sm:$0xff]
          %v1311 = vld [vmem:[#allocation2 + $0xc8] sm:$0xff]
          %v1312 = vld [vmem:[#allocation2 + $0xd0] sm:$0xff]
          %v1313 = vld [vmem:[#allocation2 + $0xd8] sm:$0xff]
          %v1314 = vld [vmem:[#allocation2 + $0xe0] sm:$0xff]
          %v1315 = vld [vmem:[#allocation2 + $0xe8] sm:$0xff]
          %v1316 = vld [vmem:[#allocation2 + $0xf0] sm:$0xff]
          %v1317 = vld [vmem:[#allocation2 + $0xf8] sm:$0xff]
          %v1318 = vadd.f32 %v1286, %v1150
          %v1319 = vadd.f32 %v1287, %v1152
          %v1320 = vadd.f32 %v1288, %v1156
          %v1321 = vadd.f32 %v1289, %v1158
          %v1322 = vadd.f32 %v1290, %v1162
          %v1323 = vadd.f32 %v1291, %v1164
          %v1324 = vadd.f32 %v1292, %v1168
          %v1325 = vadd.f32 %v1293, %v1170
          %v1326 = vadd.f32 %v1294, %v1174
          %v1327 = vadd.f32 %v1295, %v1176
          %v1328 = vadd.f32 %v1296, %v1180
          %v1329 = vadd.f32 %v1297, %v1182
          %v1330 = vadd.f32 %v1298, %v1186
          %v1331 = vadd.f32 %v1299, %v1188
          %v1332 = vadd.f32 %v1300, %v1192
          %v1333 = vadd.f32 %v1301, %v1194
          %v1334 = vadd.f32 %v1302, %v1198
          %v1335 = vadd.f32 %v1303, %v1200
          %v1336 = vadd.f32 %v1304, %v1204
          %v1337 = vadd.f32 %v1305, %v1206
          %v1338 = vadd.f32 %v1306, %v1210
          %v1339 = vadd.f32 %v1307, %v1212
          %v1340 = vadd.f32 %v1308, %v1216
          %v1341 = vadd.f32 %v1309, %v1218
          %v1342 = vadd.f32 %v1310, %v1222
          %v1343 = vadd.f32 %v1311, %v1224
          %v1344 = vadd.f32 %v1312, %v1228
          %v1345 = vadd.f32 %v1313, %v1230
          %v1346 = vadd.f32 %v1314, %v1234
          %v1347 = vadd.f32 %v1315, %v1236
          %v1348 = vadd.f32 %v1316, %v1240
          %v1349 = vadd.f32 %v1317, %v1242
          %1350 = vst [vmem:[#allocation2] sm:$0xff] %v1318
          %1351 = vst [vmem:[#allocation2 + $0x8] sm:$0xff] %v1319
          %1352 = vst [vmem:[#allocation2 + $0x10] sm:$0xff] %v1320
          %1353 = vst [vmem:[#allocation2 + $0x18] sm:$0xff] %v1321
          %1354 = vst [vmem:[#allocation2 + $0x20] sm:$0xff] %v1322
          %1355 = vst [vmem:[#allocation2 + $0x28] sm:$0xff] %v1323
          %1356 = vst [vmem:[#allocation2 + $0x30] sm:$0xff] %v1324
          %1357 = vst [vmem:[#allocation2 + $0x38] sm:$0xff] %v1325
          %1358 = vst [vmem:[#allocation2 + $0x40] sm:$0xff] %v1326
          %1359 = vst [vmem:[#allocation2 + $0x48] sm:$0xff] %v1327
          %1360 = vst [vmem:[#allocation2 + $0x50] sm:$0xff] %v1328
          %1361 = vst [vmem:[#allocation2 + $0x58] sm:$0xff] %v1329
          %1362 = vst [vmem:[#allocation2 + $0x60] sm:$0xff] %v1330
          %1363 = vst [vmem:[#allocation2 + $0x68] sm:$0xff] %v1331
          %1364 = vst [vmem:[#allocation2 + $0x70] sm:$0xff] %v1332
          %1365 = vst [vmem:[#allocation2 + $0x78] sm:$0xff] %v1333
          %1366 = vst [vmem:[#allocation2 + $0x80] sm:$0xff] %v1334
          %1367 = vst [vmem:[#allocation2 + $0x88] sm:$0xff] %v1335
          %1368 = vst [vmem:[#allocation2 + $0x90] sm:$0xff] %v1336
          %1369 = vst [vmem:[#allocation2 + $0x98] sm:$0xff] %v1337
          %1370 = vst [vmem:[#allocation2 + $0xa0] sm:$0xff] %v1338
          %1371 = vst [vmem:[#allocation2 + $0xa8] sm:$0xff] %v1339
          %1372 = vst [vmem:[#allocation2 + $0xb0] sm:$0xff] %v1340
          %1373 = vst [vmem:[#allocation2 + $0xb8] sm:$0xff] %v1341
          %1374 = vst [vmem:[#allocation2 + $0xc0] sm:$0xff] %v1342
          %1375 = vst [vmem:[#allocation2 + $0xc8] sm:$0xff] %v1343
          %1376 = vst [vmem:[#allocation2 + $0xd0] sm:$0xff] %v1344
          %1377 = vst [vmem:[#allocation2 + $0xd8] sm:$0xff] %v1345
          %1378 = vst [vmem:[#allocation2 + $0xe0] sm:$0xff] %v1346
          %1379 = vst [vmem:[#allocation2 + $0xe8] sm:$0xff] %v1347
          %1380 = vst [vmem:[#allocation2 + $0xf0] sm:$0xff] %v1348
          %1381 = vst [vmem:[#allocation2 + $0xf8] sm:$0xff] %v1349
        $region52: #{tpu_custom_call.1} parent=31 // pred_fallthru
          _
        %p1382 = scmp.eq.s32.totalorder %s28, 1
        // Predicated region
        $region53: #{tpu_custom_call.1} parent=31 // pred_check
          %p1383 = pneg %p1382
        $region54: #{tpu_custom_call.1} parent=31 // pred_check_branch
          %1385 = sbr.rel (%p1383) target = $region56
        $region55: #{tpu_custom_call.1} parent=31 // pred_region
          %v1386 = vld [vmem:[#allocation2] sm:$0xff]
          %v1387 = vld [vmem:[#allocation2 + $0x8] sm:$0xff]
          %v1388 = vld [vmem:[#allocation2 + $0x10] sm:$0xff]
          %v1389 = vld [vmem:[#allocation2 + $0x18] sm:$0xff]
          %v1390 = vld [vmem:[#allocation2 + $0x20] sm:$0xff]
          %v1391 = vld [vmem:[#allocation2 + $0x28] sm:$0xff]
          %v1392 = vld [vmem:[#allocation2 + $0x30] sm:$0xff]
          %v1393 = vld [vmem:[#allocation2 + $0x38] sm:$0xff]
          %v1394 = vld [vmem:[#allocation2 + $0x40] sm:$0xff]
          %v1395 = vld [vmem:[#allocation2 + $0x48] sm:$0xff]
          %v1396 = vld [vmem:[#allocation2 + $0x50] sm:$0xff]
          %v1397 = vld [vmem:[#allocation2 + $0x58] sm:$0xff]
          %v1398 = vld [vmem:[#allocation2 + $0x60] sm:$0xff]
          %v1399 = vld [vmem:[#allocation2 + $0x68] sm:$0xff]
          %v1400 = vld [vmem:[#allocation2 + $0x70] sm:$0xff]
          %v1401 = vld [vmem:[#allocation2 + $0x78] sm:$0xff]
          %v1402 = vld [vmem:[#allocation2 + $0x80] sm:$0xff]
          %v1403 = vld [vmem:[#allocation2 + $0x88] sm:$0xff]
          %v1404 = vld [vmem:[#allocation2 + $0x90] sm:$0xff]
          %v1405 = vld [vmem:[#allocation2 + $0x98] sm:$0xff]
          %v1406 = vld [vmem:[#allocation2 + $0xa0] sm:$0xff]
          %v1407 = vld [vmem:[#allocation2 + $0xa8] sm:$0xff]
          %v1408 = vld [vmem:[#allocation2 + $0xb0] sm:$0xff]
          %v1409 = vld [vmem:[#allocation2 + $0xb8] sm:$0xff]
          %v1410 = vld [vmem:[#allocation2 + $0xc0] sm:$0xff]
          %v1411 = vld [vmem:[#allocation2 + $0xc8] sm:$0xff]
          %v1412 = vld [vmem:[#allocation2 + $0xd0] sm:$0xff]
          %v1413 = vld [vmem:[#allocation2 + $0xd8] sm:$0xff]
          %v1414 = vld [vmem:[#allocation2 + $0xe0] sm:$0xff]
          %v1415 = vld [vmem:[#allocation2 + $0xe8] sm:$0xff]
          %v1416 = vld [vmem:[#allocation2 + $0xf0] sm:$0xff]
          %v1417 = vld [vmem:[#allocation2 + $0xf8] sm:$0xff]
          %v1418 = vadd.f32 %v1386, %v1150
          %v1419 = vadd.f32 %v1387, %v1152
          %v1420 = vadd.f32 %v1388, %v1156
          %v1421 = vadd.f32 %v1389, %v1158
          %v1422 = vadd.f32 %v1390, %v1162
          %v1423 = vadd.f32 %v1391, %v1164
          %v1424 = vadd.f32 %v1392, %v1168
          %v1425 = vadd.f32 %v1393, %v1170
          %v1426 = vadd.f32 %v1394, %v1174
          %v1427 = vadd.f32 %v1395, %v1176
          %v1428 = vadd.f32 %v1396, %v1180
          %v1429 = vadd.f32 %v1397, %v1182
          %v1430 = vadd.f32 %v1398, %v1186
          %v1431 = vadd.f32 %v1399, %v1188
          %v1432 = vadd.f32 %v1400, %v1192
          %v1433 = vadd.f32 %v1401, %v1194
          %v1434 = vadd.f32 %v1402, %v1198
          %v1435 = vadd.f32 %v1403, %v1200
          %v1436 = vadd.f32 %v1404, %v1204
          %v1437 = vadd.f32 %v1405, %v1206
          %v1438 = vadd.f32 %v1406, %v1210
          %v1439 = vadd.f32 %v1407, %v1212
          %v1440 = vadd.f32 %v1408, %v1216
          %v1441 = vadd.f32 %v1409, %v1218
          %v1442 = vadd.f32 %v1410, %v1222
          %v1443 = vadd.f32 %v1411, %v1224
          %v1444 = vadd.f32 %v1412, %v1228
          %v1445 = vadd.f32 %v1413, %v1230
          %v1446 = vadd.f32 %v1414, %v1234
          %v1447 = vadd.f32 %v1415, %v1236
          %v1448 = vadd.f32 %v1416, %v1240
          %v1449 = vadd.f32 %v1417, %v1242
          %1450 = vst [vmem:[%s278] sm:$0xff] %v1418
          %1451 = vst [vmem:[%s278 + $0x8] sm:$0xff] %v1419
          %1452 = vst [vmem:[%s278 + $0x10] sm:$0xff] %v1420
          %1453 = vst [vmem:[%s278 + $0x18] sm:$0xff] %v1421
          %1454 = vst [vmem:[%s278 + $0x20] sm:$0xff] %v1422
          %1455 = vst [vmem:[%s278 + $0x28] sm:$0xff] %v1423
          %1456 = vst [vmem:[%s278 + $0x30] sm:$0xff] %v1424
          %1457 = vst [vmem:[%s278 + $0x38] sm:$0xff] %v1425
          %1458 = vst [vmem:[%s278 + $0x40] sm:$0xff] %v1426
          %1459 = vst [vmem:[%s278 + $0x48] sm:$0xff] %v1427
          %1460 = vst [vmem:[%s278 + $0x50] sm:$0xff] %v1428
          %1461 = vst [vmem:[%s278 + $0x58] sm:$0xff] %v1429
          %1462 = vst [vmem:[%s278 + $0x60] sm:$0xff] %v1430
          %1463 = vst [vmem:[%s278 + $0x68] sm:$0xff] %v1431
          %1464 = vst [vmem:[%s278 + $0x70] sm:$0xff] %v1432
          %1465 = vst [vmem:[%s278 + $0x78] sm:$0xff] %v1433
          %1466 = vst [vmem:[%s278 + $0x80] sm:$0xff] %v1434
          %1467 = vst [vmem:[%s278 + $0x88] sm:$0xff] %v1435
          %1468 = vst [vmem:[%s278 + $0x90] sm:$0xff] %v1436
          %1469 = vst [vmem:[%s278 + $0x98] sm:$0xff] %v1437
          %1470 = vst [vmem:[%s278 + $0xa0] sm:$0xff] %v1438
          %1471 = vst [vmem:[%s278 + $0xa8] sm:$0xff] %v1439
          %1472 = vst [vmem:[%s278 + $0xb0] sm:$0xff] %v1440
          %1473 = vst [vmem:[%s278 + $0xb8] sm:$0xff] %v1441
          %1474 = vst [vmem:[%s278 + $0xc0] sm:$0xff] %v1442
          %1475 = vst [vmem:[%s278 + $0xc8] sm:$0xff] %v1443
          %1476 = vst [vmem:[%s278 + $0xd0] sm:$0xff] %v1444
          %1477 = vst [vmem:[%s278 + $0xd8] sm:$0xff] %v1445
          %1478 = vst [vmem:[%s278 + $0xe0] sm:$0xff] %v1446
          %1479 = vst [vmem:[%s278 + $0xe8] sm:$0xff] %v1447
          %1480 = vst [vmem:[%s278 + $0xf0] sm:$0xff] %v1448
          %1481 = vst [vmem:[%s278 + $0xf8] sm:$0xff] %v1449
        $region56: #{tpu_custom_call.1} parent=31 // pred_fallthru
          _
        %s1482 = sand.u32 %s121, 1
        %s1483 = scalar_lea.sflag [#allocation5], %s1482
        %s1484 = sand.u32 %s121, 1
        %s1485 = smul.addr %s1484, 256
        %s1486 = scalar_lea.vmem [#allocation9], %s1485
        // Predicated region
        $region57: #{tpu_custom_call.1} parent=31 // pred_check
          %p1487 = pneg %p131
        $region58: #{tpu_custom_call.1} parent=31 // pred_check_branch
          %1489 = sbr.rel (%p1487) target = $region60
        $region59: #{tpu_custom_call.1} parent=31 // pred_region
          %s1490 = smul.u32 16, %s27
          %s1492 = ssub.s32 4096, 4096
          %1493 = vsyncadd %s1483, %s1492
          %s1494 = smul.addr %s1490, 2
          %s1495 = smul.addr %s1494, 128
          %s1496 = scalar_lea.hbm %s3, %s1495
          %s1497 = sshll.u32 %s1486, 4
          %s1498 = int_to_ptr.vmem [resolvable:$true] %s1497
          %1503 = dma.vmem_to_hbm [thread:$0]  %s1498, 4096, %s1496, %s1483, 256, 256, 16
        $region60: #{tpu_custom_call.1} parent=31 // pred_fallthru
          _
      $region32: #{tpu_custom_call.1} parent=5 // pred_fallthru
        _
      %p1504 = scmp.le.s32.totalorder 2, %s18
      // Predicated region
      $region61: #{tpu_custom_call.1} parent=5 // pred_check
        %p1505 = pneg %p1504
      $region62: #{tpu_custom_call.1} parent=5 // pred_check_branch
        %1507 = sbr.rel (%p1505) target = $region64
      $region63: #{tpu_custom_call.1} parent=5 // pred_region
        %s1508 = ssub.s32 %s18, 2
        // Predicated region
        $region65: #{tpu_custom_call.1} parent=63 // pred_check
          %p1509 = pneg %p137
        $region66: #{tpu_custom_call.1} parent=63 // pred_check_branch
          %1511 = sbr.rel (%p1509) target = $region68
        $region67: #{tpu_custom_call.1} parent=63 // pred_region
          %s1512 = sand.u32 %s122, 1
          %s1513 = scalar_lea.sflag [#allocation5], %s1512
          %s1514 = sand.u32 %s122, 1
          %s1515 = smul.addr %s1514, 256
          %s1516 = scalar_lea.vmem [#allocation9], %s1515
          %1517 = dma.done %s1513, 4096
        $region68: #{tpu_custom_call.1} parent=63 // pred_fallthru
          _
      $region64: #{tpu_custom_call.1} parent=5 // pred_fallthru
        _
    $region6: #{tpu_custom_call.1} parent=1 // loop_footer
      %s22 = sadd.s32 1, %s18
    $region7: #{tpu_custom_call.1} parent=1 // loop_footer_branch
      %17 = sbr.rel target = $region3
    $region8: #{tpu_custom_call.1} parent=1 // loop_exit
      _
    %1518 = vsyncpa [#allocation4], 1
    %s1519 = scalar_lea.sflag [#allocation4], 1
    %1520 = vsyncpa %s1519, 1
    %1521 = vsyncpa [#allocation7], 1
    %s1522 = scalar_lea.sflag [#allocation7], 1
    %1523 = vsyncpa %s1522, 1
    %1524 = vsyncpa [#allocation5], 1
    %s1525 = scalar_lea.sflag [#allocation5], 1
    %1526 = vsyncpa %s1525, 1

</llo_original>
